<compile_context>
chip_gen: v7x
topology: tpu7x:2x2x1
jax: 0.10.0
libtpu: 0.0.40
codegen_flags: <defaults>
</compile_context>

<pallas_src>
import math
import functools

import jax
import jax.numpy as jnp
from jax.experimental import pallas as pl
from jax.experimental.pallas import tpu as pltpu


def ffn_kernel(x_ref, w1_ref, b1_ref, w2_ref, b2_ref, o_ref):
    # x_ref:  (tm, D)  in dtype   w1_ref: (D, th) bf16   b1_ref: (1, th) f32
    # w2_ref: (th, D)  bf16       b2_ref: (1, D)  f32    o_ref:  (tm, D)
    k = pl.program_id(1)

    # First linear: bf16 MXU operands, f32 accumulation; bias + SiLU in f32 (VPU/EUP).
    x_bf = x_ref[...].astype(jnp.bfloat16)
    h = jnp.dot(x_bf, w1_ref[...], preferred_element_type=jnp.float32)
    h = h + b1_ref[...]
    h = h * jax.nn.sigmoid(h)            # SiLU / Swish (dropout is identity at inference)

    # Second linear: partial product for this H-chunk.
    partial = jnp.dot(h.astype(jnp.bfloat16), w2_ref[...],
                      preferred_element_type=jnp.float32)

    # o_ref's block index is independent of k, so it stays VMEM-resident across the reduction:
    # accumulate directly into it (no scratch needed).
    @pl.when(k == 0)
    def _():
        o_ref[...] = (partial + b2_ref[...]).astype(o_ref.dtype)

    @pl.when(k > 0)
    def _():
        o_ref[...] = (o_ref[...] + partial).astype(o_ref.dtype)


def _round_up(x, m):
    return ((x + m - 1) // m) * m


@functools.partial(jax.jit, static_argnames=("tm", "th"))
def feed_forward_module(inputs, w1, b1, w2, b2, *, tm=None, th=None):
    """inputs: (B, T, D). Returns (B, T, D) in inputs.dtype (f32 accumulation inside)."""
    B, T, D = inputs.shape
    H = w1.shape[1]
    M = B * T

    # ---- hidden-dim tiling: keep both weight matrices VMEM-resident when they fit ----
    weight_bytes = 2 * D * H * 2                       # W1 + W2 in bf16
    RESIDENT_BUDGET = 36 * 1024 * 1024                 # conservative vs v7x 64 MiB (2x buffering headroom)
    if th is None:
        if 2 * weight_bytes <= RESIDENT_BUDGET:
            th = H                                     # fully resident: no weight re-streaming at all
        else:
            th = 512 if H % 512 == 0 else H            # stream H in lane-aligned chunks
    th = min(th, H)
    assert H % th == 0 and (th % 128 == 0 or th == H), \
        "hidden tile must divide H and be lane-aligned (or equal H)"
    grid_k = H // th

    # ---- row tiling: big MXU-friendly tiles, but keep grid_m >= 2 for v7x megacore ----
    if tm is None:
        if M <= 128:
            tm = M                                     # block == full dim is always legal
        else:
            tm = min(512, _round_up(pl.cdiv(M, 2), 128))

    # When streaming k we must accumulate in f32 in o_ref; resident path can emit inputs.dtype.
    out_dtype = inputs.dtype if grid_k == 1 else jnp.float32
    out_bytes = jnp.dtype(out_dtype).itemsize
    in_bytes = jnp.dtype(inputs.dtype).itemsize

    def _vmem_estimate(tm_):
        return (2 * (tm_ * D * in_bytes                 # x tile (double-buffered)
                     + D * th * 2 + th * D * 2          # W1 / W2 tiles (budget 2x even if resident)
                     + th * 4 + D * 4)                  # biases (f32)
                + 2 * tm_ * D * out_bytes               # output tile
                + tm_ * th * (4 + 2))                   # f32 h intermediate + its bf16 copy

    while _vmem_estimate(tm) > 44 * 1024 * 1024 and tm > 128:
        tm = max(128, tm // 2)
    grid_m = pl.cdiv(M, tm)
    vmem_limit = int(min(48 * 1024 * 1024, _vmem_estimate(tm) * 1.25 + (1 << 20)))

    # Activations stay in their input dtype (cast to bf16 inside the kernel, under the MXU);
    # weights should already be bf16 from parameter load (astype is a no-op then).
    x2d = inputs.reshape(M, D)
    w1_bf = w1 if w1.dtype == jnp.bfloat16 else w1.astype(jnp.bfloat16)
    w2_bf = w2 if w2.dtype == jnp.bfloat16 else w2.astype(jnp.bfloat16)
    b1_2d = b1.reshape(1, H).astype(jnp.float32)
    b2_2d = b2.reshape(1, D).astype(jnp.float32)

    cost = pl.CostEstimate(
        flops=4 * M * D * H,                                       # two GEMMs
        transcendentals=M * H,                                     # sigmoid
        bytes_accessed=(M * D * in_bytes                           # x
                        + (1 if grid_k == 1 else grid_m) * weight_bytes
                        + (H + D) * 4                              # biases
                        + M * D * out_bytes))                      # output

    out2d = pl.pallas_call(
        ffn_kernel,
        out_shape=jax.ShapeDtypeStruct((M, D), out_dtype),
        grid_spec=pltpu.PrefetchScalarGridSpec(
            num_scalar_prefetch=0,
            grid=(grid_m, grid_k),
            in_specs=[
                pl.BlockSpec((tm, D), lambda i, k: (i, 0)),   # x row tile
                pl.BlockSpec((D, th), lambda i, k: (0, k)),   # W1 (constant index when resident)
                pl.BlockSpec((1, th), lambda i, k: (0, k)),   # b1 chunk
                pl.BlockSpec((th, D), lambda i, k: (k, 0)),   # W2 (constant index when resident)
                pl.BlockSpec((1, D), lambda i, k: (0, 0)),    # b2 (constant)
            ],
            out_specs=pl.BlockSpec((tm, D), lambda i, k: (i, 0)),
        ),
        compiler_params=pltpu.CompilerParams(
            dimension_semantics=("parallel", "arbitrary"),
            vmem_limit_bytes=vmem_limit),
        cost_estimate=cost,
    )(x2d, w1_bf, b1_2d, w2_bf, b2_2d)

    if out2d.dtype != inputs.dtype:
        out2d = out2d.astype(inputs.dtype)
    return out2d.reshape(B, T, D)


def init_params(key, encoder_dim, expansion_factor):
    """Deterministic init mimicking PyTorch nn.Linear default (uniform +/- 1/sqrt(fan_in)).

    Weights are returned as (in, out) — the transpose of PyTorch's (out, in) layout — and
    pre-cast to bf16 once here (parameter-load time); biases stay f32.
    """
    H = encoder_dim * expansion_factor
    k1, k2, k3, k4 = jax.random.split(key, 4)
    bound1 = 1.0 / math.sqrt(encoder_dim)
    bound2 = 1.0 / math.sqrt(H)
    w1 = jax.random.uniform(k1, (encoder_dim, H), jnp.float32, -bound1, bound1)
    b1 = jax.random.uniform(k2, (H,), jnp.float32, -bound1, bound1)
    w2 = jax.random.uniform(k3, (H, encoder_dim), jnp.float32, -bound2, bound2)
    b2 = jax.random.uniform(k4, (encoder_dim,), jnp.float32, -bound2, bound2)
    return w1.astype(jnp.bfloat16), b1, w2.astype(jnp.bfloat16), b2


if __name__ == "__main__":
    # Small shapes consistent with the module's (batch, time, dim) interface.
    B, T = 2, 128
    encoder_dim = 128
    expansion_factor = 4

    key = jax.random.PRNGKey(0)
    kx, kp = jax.random.split(key)
    x = jax.random.normal(kx, (B, T, encoder_dim), jnp.float32)
    w1, b1, w2, b2 = init_params(kp, encoder_dim, expansion_factor)

    # Reference in plain JAX f32 with the same bf16-rounded weights (dropout is identity at eval).
    h_ref = x.reshape(-1, encoder_dim) @ w1.astype(jnp.float32) + b1
    h_ref = h_ref * jax.nn.sigmoid(h_ref)
    ref = (h_ref @ w2.astype(jnp.float32) + b2).reshape(B, T, encoder_dim)

    # 1) Default path: weights VMEM-resident, single k step, auto row tiling (grid_m >= 2).
    out_resident = feed_forward_module(x, w1, b1, w2, b2)
    out_resident = jax.block_until_ready(out_resident)
    assert out_resident.shape == ref.shape
    assert jnp.allclose(out_resident, ref, atol=2e-2, rtol=2e-2), "mismatch (resident path)"

    # 2) Force the k-streaming / in-place o_ref accumulation path for coverage.
    out_streamed = feed_forward_module(x, w1, b1, w2, b2, th=128)
    out_streamed = jax.block_until_ready(out_streamed)
    assert jnp.allclose(out_streamed, ref, atol=2e-2, rtol=2e-2), "mismatch (streaming path)"

    print("KERNEL_OK")
</pallas_src>

<mosaic_0001>
module attributes {stable_mosaic.version = 11 : i64} {
  func.func @ffn_kernel(%arg0: i32, %arg1: i32, %arg2: memref<128x128xf32, #tpu.memory_space<vmem>>, %arg3: memref<128x512xbf16, #tpu.memory_space<vmem>>, %arg4: memref<1x512xf32, #tpu.memory_space<vmem>>, %arg5: memref<512x128xbf16, #tpu.memory_space<vmem>>, %arg6: memref<1x128xf32, #tpu.memory_space<vmem>>, %arg7: memref<128x128xf32, #tpu.memory_space<vmem>>) attributes {dimension_semantics = [#tpu.dimension_semantics<parallel>, #tpu.dimension_semantics<arbitrary>], iteration_bounds = array<i64: 2, 1>, scalar_prefetch = 0 : i64, scratch_operands = 0 : i64, tpu.core_type = #tpu.core_type<tc>, window_params = [{transform_indices = @transform_0, window_bounds = array<i64: 128, 128>}, {transform_indices = @transform_1, window_bounds = array<i64: 128, 512>}, {transform_indices = @transform_2, window_bounds = array<i64: 1, 512>}, {transform_indices = @transform_3, window_bounds = array<i64: 512, 128>}, {pipeline_mode = #tpu.pipeline_mode<synchronous>, transform_indices = @transform_4, window_bounds = array<i64: 1, 128>}, {transform_indices = @transform_5, window_bounds = array<i64: 128, 128>}]} {
    %c0 = arith.constant 0 : index
    %c0_0 = arith.constant 0 : index
    %0 = vector.load %arg2[%c0, %c0_0] : memref<128x128xf32, #tpu.memory_space<vmem>>, vector<128x128xf32>
    %1 = arith.truncf %0 : vector<128x128xf32> to vector<128x128xbf16>
    %c0_1 = arith.constant 0 : index
    %c0_2 = arith.constant 0 : index
    %2 = vector.load %arg3[%c0_1, %c0_2] : memref<128x512xbf16, #tpu.memory_space<vmem>>, vector<128x512xbf16>
    %cst = arith.constant dense<0.000000e+00> : vector<128x512xf32>
    %3 = tpu.matmul %1, %2, %cst {dimension_numbers = #tpu.dot_dimension_numbers<[1], [0], [0], [1], [0, 0, 1, 1], [], []>} : vector<128x128xbf16>, vector<128x512xbf16>, vector<128x512xf32> -> vector<128x512xf32>
    %c0_3 = arith.constant 0 : index
    %c0_4 = arith.constant 0 : index
    %4 = vector.load %arg4[%c0_3, %c0_4] : memref<1x512xf32, #tpu.memory_space<vmem>>, vector<1x512xf32>
    %5 = vector.broadcast %4 : vector<1x512xf32> to vector<128x512xf32>
    %6 = arith.addf %3, %5 : vector<128x512xf32>
    %7 = arith.negf %6 : vector<128x512xf32>
    %8 = math.exp %7 : vector<128x512xf32>
    %cst_5 = arith.constant 1.000000e+00 : f32
    %9 = vector.broadcast %cst_5 : f32 to vector<128x512xf32>
    %10 = arith.addf %9, %8 : vector<128x512xf32>
    %11 = arith.divf %9, %10 : vector<128x512xf32>
    %12 = arith.mulf %6, %11 : vector<128x512xf32>
    %13 = arith.truncf %12 : vector<128x512xf32> to vector<128x512xbf16>
    %c0_6 = arith.constant 0 : index
    %c0_7 = arith.constant 0 : index
    %14 = vector.load %arg5[%c0_6, %c0_7] : memref<512x128xbf16, #tpu.memory_space<vmem>>, vector<512x128xbf16>
    %cst_8 = arith.constant dense<0.000000e+00> : vector<128x128xf32>
    %15 = tpu.matmul %13, %14, %cst_8 {dimension_numbers = #tpu.dot_dimension_numbers<[1], [0], [0], [1], [0, 0, 1, 1], [], []>} : vector<128x512xbf16>, vector<512x128xbf16>, vector<128x128xf32> -> vector<128x128xf32>
    %c0_i32 = arith.constant 0 : i32
    %16 = arith.cmpi eq, %arg1, %c0_i32 : i32
    %17 = arith.extui %16 : i1 to i32
    %c0_i32_9 = arith.constant 0 : i32
    %18 = arith.cmpi ne, %17, %c0_i32_9 : i32
    scf.if %18 {
      %c0_12 = arith.constant 0 : index
      %c0_13 = arith.constant 0 : index
      %22 = vector.load %arg6[%c0_12, %c0_13] : memref<1x128xf32, #tpu.memory_space<vmem>>, vector<1x128xf32>
      %23 = vector.broadcast %22 : vector<1x128xf32> to vector<128x128xf32>
      %24 = arith.addf %15, %23 : vector<128x128xf32>
      %c0_14 = arith.constant 0 : index
      %c0_15 = arith.constant 0 : index
      %25 = vector.load %arg7[%c0_14, %c0_15] : memref<128x128xf32, #tpu.memory_space<vmem>>, vector<128x128xf32>
      tpu.vector_store %arg7[%c0_14, %c0_15], %24 {strides = array<i32>} : memref<128x128xf32, #tpu.memory_space<vmem>>, vector<128x128xf32>,
    } else {
    }
    %c0_i32_10 = arith.constant 0 : i32
    %19 = arith.cmpi sgt, %arg1, %c0_i32_10 : i32
    %20 = arith.extui %19 : i1 to i32
    %c0_i32_11 = arith.constant 0 : i32
    %21 = arith.cmpi ne, %20, %c0_i32_11 : i32
    scf.if %21 {
      %c0_12 = arith.constant 0 : index
      %c0_13 = arith.constant 0 : index
      %22 = vector.load %arg7[%c0_12, %c0_13] : memref<128x128xf32, #tpu.memory_space<vmem>>, vector<128x128xf32>
      %23 = arith.addf %22, %15 : vector<128x128xf32>
      %c0_14 = arith.constant 0 : index
      %c0_15 = arith.constant 0 : index
      %24 = vector.load %arg7[%c0_14, %c0_15] : memref<128x128xf32, #tpu.memory_space<vmem>>, vector<128x128xf32>
      tpu.vector_store %arg7[%c0_14, %c0_15], %23 {strides = array<i32>} : memref<128x128xf32, #tpu.memory_space<vmem>>, vector<128x128xf32>,
    } else {
    }
    return
  }
  func.func @transform_0(%arg0: i32, %arg1: i32) -> (i32, i32) {
    %c0_i32 = arith.constant 0 : i32
    %c0_i32_0 = arith.constant 0 : i32
    return %arg0, %c0_i32 : i32, i32
  }
  func.func @transform_1(%arg0: i32, %arg1: i32) -> (i32, i32) {
    %c0_i32 = arith.constant 0 : i32
    %c0_i32_0 = arith.constant 0 : i32
    return %c0_i32, %arg1 : i32, i32
  }
  func.func @transform_2(%arg0: i32, %arg1: i32) -> (i32, i32) {
    %c0_i32 = arith.constant 0 : i32
    %c0_i32_0 = arith.constant 0 : i32
    return %c0_i32, %arg1 : i32, i32
  }
  func.func @transform_3(%arg0: i32, %arg1: i32) -> (i32, i32) {
    %c0_i32 = arith.constant 0 : i32
    %c0_i32_0 = arith.constant 0 : i32
    return %arg1, %c0_i32 : i32, i32
  }
  func.func @transform_4(%arg0: i32, %arg1: i32) -> (i32, i32) {
    %c0_i32 = arith.constant 0 : i32
    %c0_i32_0 = arith.constant 0 : i32
    %c0_i32_1 = arith.constant 0 : i32
    return %c0_i32, %c0_i32_0 : i32, i32
  }
  func.func @transform_5(%arg0: i32, %arg1: i32) -> (i32, i32) {
    %c0_i32 = arith.constant 0 : i32
    %c0_i32_0 = arith.constant 0 : i32
    return %arg0, %c0_i32 : i32, i32
  }
}

</mosaic_0001>

<llo_original>
// kernel: feed_forward_module.1
$region0: #{feed_forward_module.1}
  #allocation0 [shape = 'u32[]', space=smem, size = 0x4, offset = 0x4, fixed_abs, tag = 'smem constant byte address 0x4 - core index']
  #allocation1 [shape = 'u32[144,128]{1,0:T(1,128)}', space=vmem, size = 0x12000, scoped, tag = 'internal scratch']
  %s0 = inlined_call_operand.hbm [shape: f32[256,128], index: 0, kind: input, shape index: {}]
  %s1 = inlined_call_operand.hbm [shape: bf16[128,512], index: 1, kind: input, shape index: {}]
  %s2 = inlined_call_operand.vmem [shape: f32[1,512], index: 2, kind: input, shape index: {}]
  %s3 = inlined_call_operand.hbm [shape: bf16[512,128], index: 3, kind: input, shape index: {}]
  %s4 = inlined_call_operand.vmem [shape: f32[1,128], index: 4, kind: input, shape index: {}]
  %s5 = inlined_call_operand.hbm [shape: f32[256,128], index: 5, kind: output, shape index: {}]
  %s6 = sld [smem:[#allocation0]]
  $region73: #{feed_forward_module.1} parent=0
    _
  %s8 = ssub.s32 1, %s6
  %s9 = scalar_select 0, %s8, %s6
  $region1: #{feed_forward_module.1} parent=0
    #allocation2 [shape = 'u8[131072]{0}', space=vmem, size = 0x20000, scoped, tag = 'input window, operand 0']
    #allocation3 [shape = 's32[2]{0}', space=sflag, size = 0x8, scoped, tag = 'scoped memory for feed_forward_module.1']
    #allocation4 [shape = 's32[2]{0}', space=sflag, size = 0x8, scoped, tag = 'scoped memory for feed_forward_module.1']
    #allocation5 [shape = 'u8[131072]{0}', space=vmem, size = 0x20000, scoped, tag = 'input window, operand 1, single buffered']
    #allocation6 [shape = 's32[1]{0}', space=sflag, size = 0x4, scoped, tag = 'scoped memory for feed_forward_module.1']
    #allocation7 [shape = 'u8[131072]{0}', space=vmem, size = 0x20000, scoped, tag = 'input window, operand 3, single buffered']
    #allocation8 [shape = 'u8[131072]{0}', space=vmem, size = 0x20000, scoped, tag = 'output window, operand 0']
    %10 = vsyncpa [#allocation3], 0
    %s11 = scalar_lea.sflag [#allocation3], 1
    %12 = vsyncpa %s11, 0
    %13 = vsyncpa [#allocation6], 0
    %14 = vsyncpa [#allocation4], 0
    %s15 = scalar_lea.sflag [#allocation4], 1
    %16 = vsyncpa %s15, 0
    loop: start=0, step=1, limit=4
    $region2: #{feed_forward_module.1} parent=1 // loop_pre_header
      _
    $region3: #{feed_forward_module.1} parent=1 // loop_header
      %s18 = sphi 0, %s22
      %p19 = scmp.ge.s32.totalorder %s18, 4
      %s25 = sphi 0, %s37
      %s26 = sphi 0, %s33
      %s27 = sphi 0, %s25
      %s28 = sphi 0, %s26
      %s29 = sphi 0, %s27
      %s30 = sphi 0, %s28
      %s40 = sphi 0, %s42
      %s43 = sphi 0, %s40
      %s44 = sphi 0, %s43
      %s60 = sphi 0, %s44
      %s66 = sphi 0, %s68
      %s69 = sphi 0, %s66
      %s70 = sphi 0, %s69
      %s86 = sphi 0, %s70
      %s92 = sphi 0, %s94
      %s95 = sphi 0, %s92
      %s96 = sphi 0, %s95
      %s112 = sphi 0, %s96
      %s118 = sphi 0, %s120
      %s121 = sphi 0, %s118
      %s122 = sphi 0, %s121
      %s138 = sphi 0, %s122
      %s142 = sphi 0, %s142
      %s144 = sphi 0, %s142
      %s145 = sphi 0, %s144
      %s159 = sphi 0, %s145
      %s165 = sphi 0, %s167
      %s168 = sphi 0, %s165
      %s169 = sphi 0, %s168
      %s185 = sphi 0, %s169
    $region4: #{feed_forward_module.1} parent=1 // loop_header_branch
      %21 = sbr.rel (%p19) target = $region8
    $region5: #{feed_forward_module.1} parent=1 // loop_body
      %s23 = ssub.s32 %s18, 1
      %s24 = ssub.s32 %s18, 2
      %s31 = sadd.s32 1, %s26
      %p32 = scmp.ge.s32.totalorder %s31, 1
      %s33 = scalar_select %p32, 0, %s31
      %s34 = sadd.s32 1, %s25
      %s35 = scalar_select %p32, %s34, %s25
      %p36 = scmp.ge.s32.totalorder %s35, 2
      %s37 = scalar_select %p36, 0, %s35
      %s38 = ssub.s32 %s25, %s37
      %p39 = scmp.eq.s32.totalorder %s38, 0
      %s41 = sadd.s32 %s40, 1
      %s42 = scalar_select %p39, %s40, %s41
      %p45 = pneg %p39
      %p46 = scmp.eq.s32.totalorder %s18, 1
      %p47 = por %p45, %p46
      %p48 = scmp.ne.s32.totalorder %s40, %s43
      %p49 = scmp.eq.s32.totalorder %s18, 0
      %p50 = por %p48, %p49
      %p51 = scmp.ne.s32.totalorder %s40, %s43
      %p52 = scmp.eq.s32.totalorder %s23, 1
      %p53 = por %p51, %p52
      %p54 = scmp.ne.s32.totalorder %s43, %s44
      %p55 = scmp.eq.s32.totalorder %s23, 0
      %p56 = por %p54, %p55
      %p57 = scmp.ne.s32.totalorder %s43, %s44
      %p58 = scmp.eq.s32.totalorder %s24, 1
      %p59 = por %p57, %p58
      %p61 = scmp.ne.s32.totalorder %s44, %s60
      %p62 = scmp.eq.s32.totalorder %s24, 0
      %p63 = por %p61, %p62
      %s64 = ssub.s32 %s26, %s33
      %p65 = scmp.eq.s32.totalorder %s64, 0
      %s67 = sadd.s32 %s66, 1
      %s68 = scalar_select %p65, %s66, %s67
      %p71 = pneg %p65
      %p72 = scmp.eq.s32.totalorder %s18, 1
      %p73 = por %p71, %p72
      %p74 = scmp.ne.s32.totalorder %s66, %s69
      %p75 = scmp.eq.s32.totalorder %s18, 0
      %p76 = por %p74, %p75
      %p77 = scmp.ne.s32.totalorder %s66, %s69
      %p78 = scmp.eq.s32.totalorder %s23, 1
      %p79 = por %p77, %p78
      %p80 = scmp.ne.s32.totalorder %s69, %s70
      %p81 = scmp.eq.s32.totalorder %s23, 0
      %p82 = por %p80, %p81
      %p83 = scmp.ne.s32.totalorder %s69, %s70
      %p84 = scmp.eq.s32.totalorder %s24, 1
      %p85 = por %p83, %p84
      %p87 = scmp.ne.s32.totalorder %s70, %s86
      %p88 = scmp.eq.s32.totalorder %s24, 0
      %p89 = por %p87, %p88
      %s90 = ssub.s32 %s26, %s33
      %p91 = scmp.eq.s32.totalorder %s90, 0
      %s93 = sadd.s32 %s92, 1
      %s94 = scalar_select %p91, %s92, %s93
      %p97 = pneg %p91
      %p98 = scmp.eq.s32.totalorder %s18, 1
      %p99 = por %p97, %p98
      %p100 = scmp.ne.s32.totalorder %s92, %s95
      %p101 = scmp.eq.s32.totalorder %s18, 0
      %p102 = por %p100, %p101
      %p103 = scmp.ne.s32.totalorder %s92, %s95
      %p104 = scmp.eq.s32.totalorder %s23, 1
      %p105 = por %p103, %p104
      %p106 = scmp.ne.s32.totalorder %s95, %s96
      %p107 = scmp.eq.s32.totalorder %s23, 0
      %p108 = por %p106, %p107
      %p109 = scmp.ne.s32.totalorder %s95, %s96
      %p110 = scmp.eq.s32.totalorder %s24, 1
      %p111 = por %p109, %p110
      %p113 = scmp.ne.s32.totalorder %s96, %s112
      %p114 = scmp.eq.s32.totalorder %s24, 0
      %p115 = por %p113, %p114
      %s116 = ssub.s32 %s26, %s33
      %p117 = scmp.eq.s32.totalorder %s116, 0
      %s119 = sadd.s32 %s118, 1
      %s120 = scalar_select %p117, %s118, %s119
      %p123 = pneg %p117
      %p124 = scmp.eq.s32.totalorder %s18, 1
      %p125 = por %p123, %p124
      %p126 = scmp.ne.s32.totalorder %s118, %s121
      %p127 = scmp.eq.s32.totalorder %s18, 0
      %p128 = por %p126, %p127
      %p129 = scmp.ne.s32.totalorder %s118, %s121
      %p130 = scmp.eq.s32.totalorder %s23, 1
      %p131 = por %p129, %p130
      %p132 = scmp.ne.s32.totalorder %s121, %s122
      %p133 = scmp.eq.s32.totalorder %s23, 0
      %p134 = por %p132, %p133
      %p135 = scmp.ne.s32.totalorder %s121, %s122
      %p136 = scmp.eq.s32.totalorder %s24, 1
      %p137 = por %p135, %p136
      %p139 = scmp.ne.s32.totalorder %s122, %s138
      %p140 = scmp.eq.s32.totalorder %s24, 0
      %p141 = por %p139, %p140
      %s143 = sadd.s32 %s142, 1
      %p146 = scmp.eq.s32.totalorder %s18, 1
      %p147 = scmp.ne.s32.totalorder %s142, %s144
      %p148 = scmp.eq.s32.totalorder %s18, 0
      %p149 = por %p147, %p148
      %p150 = scmp.ne.s32.totalorder %s142, %s144
      %p151 = scmp.eq.s32.totalorder %s23, 1
      %p152 = por %p150, %p151
      %p153 = scmp.ne.s32.totalorder %s144, %s145
      %p154 = scmp.eq.s32.totalorder %s23, 0
      %p155 = por %p153, %p154
      %p156 = scmp.ne.s32.totalorder %s144, %s145
      %p157 = scmp.eq.s32.totalorder %s24, 1
      %p158 = por %p156, %p157
      %p160 = scmp.ne.s32.totalorder %s145, %s159
      %p161 = scmp.eq.s32.totalorder %s24, 0
      %p162 = por %p160, %p161
      %s163 = ssub.s32 %s25, %s37
      %p164 = scmp.eq.s32.totalorder %s163, 0
      %s166 = sadd.s32 %s165, 1
      %s167 = scalar_select %p164, %s165, %s166
      %p170 = pneg %p164
      %p171 = scmp.eq.s32.totalorder %s18, 1
      %p172 = por %p170, %p171
      %p173 = scmp.ne.s32.totalorder %s165, %s168
      %p174 = scmp.eq.s32.totalorder %s18, 0
      %p175 = por %p173, %p174
      %p176 = scmp.ne.s32.totalorder %s165, %s168
      %p177 = scmp.eq.s32.totalorder %s23, 1
      %p178 = por %p176, %p177
      %p179 = scmp.ne.s32.totalorder %s168, %s169
      %p180 = scmp.eq.s32.totalorder %s23, 0
      %p181 = por %p179, %p180
      %p182 = scmp.ne.s32.totalorder %s168, %s169
      %p183 = scmp.eq.s32.totalorder %s24, 1
      %p184 = por %p182, %p183
      %p186 = scmp.ne.s32.totalorder %s169, %s185
      %p187 = scmp.eq.s32.totalorder %s24, 0
      %p188 = por %p186, %p187
      %p189 = scmp.le.s32.totalorder 1, %s18
      %p190 = scmp.lt.s32.totalorder %s18, 3
      %p191 = pnand %p189, %p190
      %p192 = pneg %p191
      // Predicated region
      $region9: #{feed_forward_module.1} parent=5 // pred_check
        _
      $region10: #{feed_forward_module.1} parent=5 // pred_check_branch
        %194 = sbr.rel (%p191) target = $region12
      $region11: #{feed_forward_module.1} parent=5 // pred_region
        %s195 = ssub.s32 %s18, 1
        // Predicated region
        $region13: #{feed_forward_module.1} parent=11 // pred_check
          %p196 = pneg %p82
        $region14: #{feed_forward_module.1} parent=11 // pred_check_branch
          %198 = sbr.rel (%p196) target = $region16
        $region15: #{feed_forward_module.1} parent=11 // pred_region
          %s199 = smul.u32 4, %s28
          %s201 = ssub.s32 4096, 4096
          %202 = vsyncadd [#allocation6], %s201
          %s203 = smul.addr %s199, 64
          %s204 = scalar_lea.hbm %s1, %s203
          %s205 = sshll.u32 [#allocation5], 4
          %s206 = int_to_ptr.vmem [resolvable:$true] %s205
          %211 = dma.hbm_to_vmem [thread:$0]  %s204, 4096, %s206, [#allocation6], 256, 256, 16
        $region16: #{feed_forward_module.1} parent=11 // pred_fallthru
          _
        // Predicated region
        $region17: #{feed_forward_module.1} parent=11 // pred_check
          %p212 = pneg %p108
        $region18: #{feed_forward_module.1} parent=11 // pred_check_branch
          %214 = sbr.rel (%p212) target = $region20
        $region19: #{feed_forward_module.1} parent=11 // pred_region
          %s215 = smul.u32 4, %s28
          %p216 = scmp.lt.s32.totalorder %s215, 3
          %s217 = scalar_select %p216, %s215, 3
          %s218 = scalar_lea.vmem %s2, %s217
          %s219 = smul.u32 4, %s28
        $region20: #{feed_forward_module.1} parent=11 // pred_fallthru
          _
        // Predicated region
        $region21: #{feed_forward_module.1} parent=11 // pred_check
          %p220 = pneg %p134
        $region22: #{feed_forward_module.1} parent=11 // pred_check_branch
          %222 = sbr.rel (%p220) target = $region24
        $region23: #{feed_forward_module.1} parent=11 // pred_region
          %s223 = smul.u32 64, %s28
          %s225 = ssub.s32 4096, 4096
          %226 = vsyncadd [#allocation6], %s225
          %s227 = smul.addr %s223, 64
          %s228 = scalar_lea.hbm %s3, %s227
          %s229 = sshll.u32 [#allocation7], 4
          %s230 = int_to_ptr.vmem [resolvable:$true] %s229
          %235 = dma.hbm_to_vmem [thread:$0]  %s228, 4096, %s230, [#allocation6], 64, 64, 4
        $region24: #{feed_forward_module.1} parent=11 // pred_fallthru
          _
        // Predicated region
        $region25: #{feed_forward_module.1} parent=11 // pred_check
          %p236 = pneg %p155
        $region26: #{feed_forward_module.1} parent=11 // pred_check_branch
          %238 = sbr.rel (%p236) target = $region28
        $region27: #{feed_forward_module.1} parent=11 // pred_region
          _
        $region28: #{feed_forward_module.1} parent=11 // pred_fallthru
          _
      $region12: #{feed_forward_module.1} parent=5 // pred_fallthru
        _
      %p239 = scmp.lt.s32.totalorder %s18, 2
      // Predicated region
      $region29: #{feed_forward_module.1} parent=5 // pred_check
        %p240 = pneg %p239
      $region30: #{feed_forward_module.1} parent=5 // pred_check_branch
        %242 = sbr.rel (%p240) target = $region32
      $region31: #{feed_forward_module.1} parent=5 // pred_region
        // Predicated region
        $region33: #{feed_forward_module.1} parent=31 // pred_check
          %p243 = pneg %p50
        $region34: #{feed_forward_module.1} parent=31 // pred_check_branch
          %245 = sbr.rel (%p243) target = $region36
        $region35: #{feed_forward_module.1} parent=31 // pred_region
          %s246 = sand.u32 %s40, 1
          %s247 = scalar_lea.sflag [#allocation3], %s246
          %s248 = sand.u32 %s40, 1
          %s249 = smul.addr %s248, 128
          %s250 = scalar_lea.vmem [#allocation2], %s249
          %s251 = smul.u32 16, %s25
          %s253 = ssub.s32 2048, 2048
          %254 = vsyncadd %s247, %s253
          %s255 = smul.addr %s251, 128
          %s256 = scalar_lea.hbm %s0, %s255
          %s257 = sshll.u32 %s250, 4
          %s258 = int_to_ptr.vmem [resolvable:$true] %s257
          %263 = dma.hbm_to_vmem [thread:$0]  %s256, 2048, %s258, %s247, 128, 128, 8
        $region36: #{feed_forward_module.1} parent=31 // pred_fallthru
          _
      $region32: #{feed_forward_module.1} parent=5 // pred_fallthru
        _
      %p264 = scmp.le.s32.totalorder 1, %s18
      %p265 = scmp.lt.s32.totalorder %s18, 3
      %p266 = pnand %p264, %p265
      %p267 = pneg %p266
      // Predicated region
      $region37: #{feed_forward_module.1} parent=5 // pred_check
        _
      $region38: #{feed_forward_module.1} parent=5 // pred_check_branch
        %269 = sbr.rel (%p266) target = $region40
      $region39: #{feed_forward_module.1} parent=5 // pred_region
        %s270 = ssub.s32 %s18, 1
        %s271 = sand.u32 %s43, 1
        %s272 = scalar_lea.sflag [#allocation3], %s271
        %s273 = sand.u32 %s43, 1
        %s274 = smul.addr %s273, 128
        %s275 = scalar_lea.vmem [#allocation2], %s274
        // Predicated region
        $region41: #{feed_forward_module.1} parent=39 // pred_check
          %p276 = pneg %p56
        $region42: #{feed_forward_module.1} parent=39 // pred_check_branch
          %278 = sbr.rel (%p276) target = $region44
        $region43: #{feed_forward_module.1} parent=39 // pred_region
          %279 = dma.done %s272, 2048
        $region44: #{feed_forward_module.1} parent=39 // pred_fallthru
          _
        // Predicated region
        $region45: #{feed_forward_module.1} parent=39 // pred_check
          %p280 = pneg %p82
        $region46: #{feed_forward_module.1} parent=39 // pred_check_branch
          %282 = sbr.rel (%p280) target = $region48
        $region47: #{feed_forward_module.1} parent=39 // pred_region
          %283 = dma.done [#allocation6], 4096
        $region48: #{feed_forward_module.1} parent=39 // pred_fallthru
          _
        // Predicated region
        $region49: #{feed_forward_module.1} parent=39 // pred_check
          %p284 = pneg %p134
        $region50: #{feed_forward_module.1} parent=39 // pred_check_branch
          %286 = sbr.rel (%p284) target = $region52
        $region51: #{feed_forward_module.1} parent=39 // pred_region
          %287 = dma.done [#allocation6], 4096
        $region52: #{feed_forward_module.1} parent=39 // pred_fallthru
          _
        %s288 = sand.u32 %s43, 1
        %s289 = scalar_lea.sflag [#allocation3], %s288
        %s290 = sand.u32 %s43, 1
        %s291 = smul.addr %s290, 128
        %s292 = scalar_lea.vmem [#allocation2], %s291
        %p293 = pneg %p56
        %p294 = pneg %p53
        %p295 = pneg %p82
        %p296 = pneg %p79
        %s297 = smul.u32 4, %s28
        %p298 = scmp.lt.s32.totalorder %s297, 3
        %s299 = scalar_select %p298, %s297, 3
        %s300 = scalar_lea.vmem %s2, %s299
        %p301 = pneg %p108
        %p302 = pneg %p105
        %p303 = pneg %p134
        %p304 = pneg %p131
        %p305 = pneg %p155
        %p306 = pneg %p152
        %p307 = pneg %p181
        %p308 = pneg %p178
        %s309 = sand.u32 %s168, 1
        %s310 = scalar_lea.sflag [#allocation4], %s309
        %s311 = sand.u32 %s168, 1
        %s312 = smul.addr %s311, 128
        %s313 = scalar_lea.vmem [#allocation8], %s312
        %s314 = smul.u32 16, %s27
        %s315 = smul.u32 4, %s28
        %s316 = smul.u32 4, %s28
        %p317 = scmp.lt.s32.totalorder %s316, 3
        %s318 = scalar_select %p317, %s316, 3
        %s319 = scalar_lea.vmem %s2, %s318
        %s320 = smul.u32 4, %s28
        %s321 = smul.u32 64, %s28
        %s322 = smul.u32 16, %s27
        %v324 = vld [vmem:[%s275] sm:$0xff]
        %v325 = vld [vmem:[%s275 + $0x8] sm:$0xff]
        %v326 = vld [vmem:[%s275 + $0x10] sm:$0xff]
        %v327 = vld [vmem:[%s275 + $0x18] sm:$0xff]
        %v328 = vld [vmem:[%s275 + $0x20] sm:$0xff]
        %v329 = vld [vmem:[%s275 + $0x28] sm:$0xff]
        %v330 = vld [vmem:[%s275 + $0x30] sm:$0xff]
        %v331 = vld [vmem:[%s275 + $0x38] sm:$0xff]
        %v332 = vld [vmem:[%s275 + $0x40] sm:$0xff]
        %v333 = vld [vmem:[%s275 + $0x48] sm:$0xff]
        %v334 = vld [vmem:[%s275 + $0x50] sm:$0xff]
        %v335 = vld [vmem:[%s275 + $0x58] sm:$0xff]
        %v336 = vld [vmem:[%s275 + $0x60] sm:$0xff]
        %v337 = vld [vmem:[%s275 + $0x68] sm:$0xff]
        %v338 = vld [vmem:[%s275 + $0x70] sm:$0xff]
        %v339 = vld [vmem:[%s275 + $0x78] sm:$0xff]
        %v340 = vpack.c.bf16 %v325, %v324
        %v341 = vpack.c.bf16 %v327, %v326
        %v342 = vpack.c.bf16 %v329, %v328
        %v343 = vpack.c.bf16 %v331, %v330
        %v344 = vpack.c.bf16 %v333, %v332
        %v345 = vpack.c.bf16 %v335, %v334
        %v346 = vpack.c.bf16 %v337, %v336
        %v347 = vpack.c.bf16 %v339, %v338
        %v348 = vld [vmem:[#allocation5] sm:$0xff]
        %v349 = vld [vmem:[#allocation5 + $0x8] sm:$0xff]
        %v350 = vld [vmem:[#allocation5 + $0x10] sm:$0xff]
        %v351 = vld [vmem:[#allocation5 + $0x18] sm:$0xff]
        %v352 = vld [vmem:[#allocation5 + $0x20] sm:$0xff]
        %v353 = vld [vmem:[#allocation5 + $0x28] sm:$0xff]
        %v354 = vld [vmem:[#allocation5 + $0x30] sm:$0xff]
        %v355 = vld [vmem:[#allocation5 + $0x38] sm:$0xff]
        %v356 = vld [vmem:[#allocation5 + $0x40] sm:$0xff]
        %v357 = vld [vmem:[#allocation5 + $0x48] sm:$0xff]
        %v358 = vld [vmem:[#allocation5 + $0x50] sm:$0xff]
        %v359 = vld [vmem:[#allocation5 + $0x58] sm:$0xff]
        %v360 = vld [vmem:[#allocation5 + $0x60] sm:$0xff]
        %v361 = vld [vmem:[#allocation5 + $0x68] sm:$0xff]
        %v362 = vld [vmem:[#allocation5 + $0x70] sm:$0xff]
        %v363 = vld [vmem:[#allocation5 + $0x78] sm:$0xff]
        %v364 = vld [vmem:[#allocation5 + $0x80] sm:$0xff]
        %v365 = vld [vmem:[#allocation5 + $0x88] sm:$0xff]
        %v366 = vld [vmem:[#allocation5 + $0x90] sm:$0xff]
        %v367 = vld [vmem:[#allocation5 + $0x98] sm:$0xff]
        %v368 = vld [vmem:[#allocation5 + $0xa0] sm:$0xff]
        %v369 = vld [vmem:[#allocation5 + $0xa8] sm:$0xff]
        %v370 = vld [vmem:[#allocation5 + $0xb0] sm:$0xff]
        %v371 = vld [vmem:[#allocation5 + $0xb8] sm:$0xff]
        %v372 = vld [vmem:[#allocation5 + $0xc0] sm:$0xff]
        %v373 = vld [vmem:[#allocation5 + $0xc8] sm:$0xff]
        %v374 = vld [vmem:[#allocation5 + $0xd0] sm:$0xff]
        %v375 = vld [vmem:[#allocation5 + $0xd8] sm:$0xff]
        %v376 = vld [vmem:[#allocation5 + $0xe0] sm:$0xff]
        %v377 = vld [vmem:[#allocation5 + $0xe8] sm:$0xff]
        %v378 = vld [vmem:[#allocation5 + $0xf0] sm:$0xff]
        %v379 = vld [vmem:[#allocation5 + $0xf8] sm:$0xff]
        %v380 = vld [vmem:[%s319] sm:$0xf]
        %v382 = vlaneseq
        %v383 = vshrl.u32 %v382, 7
        %v384 = vsub.s32 0, %v383
        %v385 = vrot.slane %v380, %v384
        %v386 = vlaneseq
        %v387 = vshrl.u32 %v386, 7
        %v388 = vsub.s32 1, %v387
        %v389 = vrot.slane %v380, %v388
        %v390 = vlaneseq
        %v391 = vshrl.u32 %v390, 7
        %v392 = vsub.s32 2, %v391
        %v393 = vrot.slane %v380, %v392
        %v394 = vlaneseq
        %v395 = vshrl.u32 %v394, 7
        %v396 = vsub.s32 3, %v395
        %v397 = vrot.slane %v380, %v396
        %v434 = vunpack.c.l.b16 %v348
        %v435 = vunpack.c.h.b16 %v348
        %v436 = vunpack.c.l.b16 %v349
        %v437 = vunpack.c.h.b16 %v349
        %v438 = vunpack.c.l.b16 %v350
        %v439 = vunpack.c.h.b16 %v350
        %v440 = vunpack.c.l.b16 %v351
        %v441 = vunpack.c.h.b16 %v351
        %v442 = vunpack.c.l.b16 %v352
        %v443 = vunpack.c.h.b16 %v352
        %v444 = vunpack.c.l.b16 %v353
        %v445 = vunpack.c.h.b16 %v353
        %v446 = vunpack.c.l.b16 %v354
        %v447 = vunpack.c.h.b16 %v354
        %v448 = vunpack.c.l.b16 %v355
        %v449 = vunpack.c.h.b16 %v355
        %v450 = vunpack.c.l.b16 %v356
        %v451 = vunpack.c.h.b16 %v356
        %v452 = vunpack.c.l.b16 %v357
        %v453 = vunpack.c.h.b16 %v357
        %v454 = vunpack.c.l.b16 %v358
        %v455 = vunpack.c.h.b16 %v358
        %v456 = vunpack.c.l.b16 %v359
        %v457 = vunpack.c.h.b16 %v359
        %v458 = vunpack.c.l.b16 %v360
        %v459 = vunpack.c.h.b16 %v360
        %v460 = vunpack.c.l.b16 %v361
        %v461 = vunpack.c.h.b16 %v361
        %v462 = vunpack.c.l.b16 %v362
        %v463 = vunpack.c.h.b16 %v362
        %v464 = vunpack.c.l.b16 %v363
        %v465 = vunpack.c.h.b16 %v363
        %v466 = vunpack.c.l.b16 %v364
        %v467 = vunpack.c.h.b16 %v364
        %v468 = vunpack.c.l.b16 %v365
        %v469 = vunpack.c.h.b16 %v365
        %v470 = vunpack.c.l.b16 %v366
        %v471 = vunpack.c.h.b16 %v366
        %v472 = vunpack.c.l.b16 %v367
        %v473 = vunpack.c.h.b16 %v367
        %v474 = vunpack.c.l.b16 %v368
        %v475 = vunpack.c.h.b16 %v368
        %v476 = vunpack.c.l.b16 %v369
        %v477 = vunpack.c.h.b16 %v369
        %v478 = vunpack.c.l.b16 %v370
        %v479 = vunpack.c.h.b16 %v370
        %v480 = vunpack.c.l.b16 %v371
        %v481 = vunpack.c.h.b16 %v371
        %v482 = vunpack.c.l.b16 %v372
        %v483 = vunpack.c.h.b16 %v372
        %v484 = vunpack.c.l.b16 %v373
        %v485 = vunpack.c.h.b16 %v373
        %v486 = vunpack.c.l.b16 %v374
        %v487 = vunpack.c.h.b16 %v374
        %v488 = vunpack.c.l.b16 %v375
        %v489 = vunpack.c.h.b16 %v375
        %v490 = vunpack.c.l.b16 %v376
        %v491 = vunpack.c.h.b16 %v376
        %v492 = vunpack.c.l.b16 %v377
        %v493 = vunpack.c.h.b16 %v377
        %v494 = vunpack.c.l.b16 %v378
        %v495 = vunpack.c.h.b16 %v378
        %v496 = vunpack.c.l.b16 %v379
        %v497 = vunpack.c.h.b16 %v379
        %v498 = vpack.c.b16 %v438, %v434
        %v499 = vpack.c.b16 %v439, %v435
        %v500 = vpack.c.b16 %v440, %v436
        %v501 = vpack.c.b16 %v441, %v437
        %v502 = vpack.c.b16 %v446, %v442
        %v503 = vpack.c.b16 %v447, %v443
        %v504 = vpack.c.b16 %v448, %v444
        %v505 = vpack.c.b16 %v449, %v445
        %v506 = vpack.c.b16 %v454, %v450
        %v507 = vpack.c.b16 %v455, %v451
        %v508 = vpack.c.b16 %v456, %v452
        %v509 = vpack.c.b16 %v457, %v453
        %v510 = vpack.c.b16 %v462, %v458
        %v511 = vpack.c.b16 %v463, %v459
        %v512 = vpack.c.b16 %v464, %v460
        %v513 = vpack.c.b16 %v465, %v461
        %v514 = vpack.c.b16 %v470, %v466
        %v515 = vpack.c.b16 %v471, %v467
        %v516 = vpack.c.b16 %v472, %v468
        %v517 = vpack.c.b16 %v473, %v469
        %v518 = vpack.c.b16 %v478, %v474
        %v519 = vpack.c.b16 %v479, %v475
        %v520 = vpack.c.b16 %v480, %v476
        %v521 = vpack.c.b16 %v481, %v477
        %v522 = vpack.c.b16 %v486, %v482
        %v523 = vpack.c.b16 %v487, %v483
        %v524 = vpack.c.b16 %v488, %v484
        %v525 = vpack.c.b16 %v489, %v485
        %v526 = vpack.c.b16 %v494, %v490
        %v527 = vpack.c.b16 %v495, %v491
        %v528 = vpack.c.b16 %v496, %v492
        %v529 = vpack.c.b16 %v497, %v493
        %562 = vmatprep.subr.bf16.mxu0 %v499
        %563 = vmatpush1.bf16.msra.mxu0 %v498
        %564 = vmatprep.subr.bf16.mxu0 %v503
        %565 = vmatpush1.bf16.msra.mxu0 %v502
        %566 = vmatprep.subr.bf16.mxu0 %v507
        %567 = vmatpush1.bf16.msra.mxu0 %v506
        %568 = vmatprep.subr.bf16.mxu0 %v511
        %569 = vmatpush1.bf16.msra.mxu0 %v510
        %570 = vmatprep.subr.bf16.mxu0 %v515
        %571 = vmatpush1.bf16.msra.mxu0 %v514
        %572 = vmatprep.subr.bf16.mxu0 %v519
        %573 = vmatpush1.bf16.msra.mxu0 %v518
        %574 = vmatprep.subr.bf16.mxu0 %v523
        %575 = vmatpush1.bf16.msra.mxu0 %v522
        %576 = vmatprep.subr.bf16.mxu0 %v527
        %577 = vmatpush1.bf16.msra.mxu0 %v526
        %578 = vmatprep.subr.bf16.mxu0 0
        %579 = vmatpush1.bf16.msra.mxu0 0
        %580 = vmatprep.subr.bf16.mxu0 0
        %581 = vmatpush1.bf16.msra.mxu0 0
        %582 = vmatprep.subr.bf16.mxu0 0
        %583 = vmatpush1.bf16.msra.mxu0 0
        %584 = vmatprep.subr.bf16.mxu0 0
        %585 = vmatpush1.bf16.msra.mxu0 0
        %586 = vmatprep.subr.bf16.mxu0 0
        %587 = vmatpush1.bf16.msra.mxu0 0
        %588 = vmatprep.subr.bf16.mxu0 0
        %589 = vmatpush1.bf16.msra.mxu0 0
        %590 = vmatprep.subr.bf16.mxu0 0
        %591 = vmatpush1.bf16.msra.mxu0 0
        %592 = vmatprep.subr.bf16.mxu0 0
        %593 = vmatpush1.bf16.msra.mxu0 0
        %594 = vmatprep.mubr.bf16.mxu0 0
        %595 = vmatmul.mubr.bf16.gmra.mrb[0].mxu0 %v340
        %v596 = vpop.f32.mrb[0].mxu0
        %v597 = vadd.f32 %v385, %v596
        %v598 = vpop.f32.mrb[0].mxu0
        %v599 = vadd.f32 %v389, %v598
        %v600 = vpop.f32.mrb[0].mxu0
        %v601 = vadd.f32 %v385, %v600
        %v602 = vpop.f32.mrb[0].mxu0
        %v603 = vadd.f32 %v389, %v602
        %604 = vmatprep.mubr.bf16.mxu0 0
        %605 = vmatmul.mubr.bf16.gmra.mrb[0].mxu0 %v341
        %v606 = vpop.f32.mrb[0].mxu0
        %v607 = vadd.f32 %v385, %v606
        %v608 = vpop.f32.mrb[0].mxu0
        %v609 = vadd.f32 %v389, %v608
        %v610 = vpop.f32.mrb[0].mxu0
        %v611 = vadd.f32 %v385, %v610
        %v612 = vpop.f32.mrb[0].mxu0
        %v613 = vadd.f32 %v389, %v612
        %614 = vmatprep.mubr.bf16.mxu0 0
        %615 = vmatmul.mubr.bf16.gmra.mrb[0].mxu0 %v342
        %v616 = vpop.f32.mrb[0].mxu0
        %v617 = vadd.f32 %v385, %v616
        %v618 = vpop.f32.mrb[0].mxu0
        %v619 = vadd.f32 %v389, %v618
        %v620 = vpop.f32.mrb[0].mxu0
        %v621 = vadd.f32 %v385, %v620
        %v622 = vpop.f32.mrb[0].mxu0
        %v623 = vadd.f32 %v389, %v622
        %624 = vmatprep.mubr.bf16.mxu0 0
        %625 = vmatmul.mubr.bf16.gmra.mrb[0].mxu0 %v343
        %v626 = vpop.f32.mrb[0].mxu0
        %v627 = vadd.f32 %v385, %v626
        %v628 = vpop.f32.mrb[0].mxu0
        %v629 = vadd.f32 %v389, %v628
        %v630 = vpop.f32.mrb[0].mxu0
        %v631 = vadd.f32 %v385, %v630
        %v632 = vpop.f32.mrb[0].mxu0
        %v633 = vadd.f32 %v389, %v632
        %634 = vmatprep.mubr.bf16.mxu0 0
        %635 = vmatmul.mubr.bf16.gmra.mrb[0].mxu0 %v344
        %v636 = vpop.f32.mrb[0].mxu0
        %v637 = vadd.f32 %v385, %v636
        %v638 = vpop.f32.mrb[0].mxu0
        %v639 = vadd.f32 %v389, %v638
        %v640 = vpop.f32.mrb[0].mxu0
        %v641 = vadd.f32 %v385, %v640
        %v642 = vpop.f32.mrb[0].mxu0
        %v643 = vadd.f32 %v389, %v642
        %644 = vmatprep.mubr.bf16.mxu0 0
        %645 = vmatmul.mubr.bf16.gmra.mrb[0].mxu0 %v345
        %v646 = vpop.f32.mrb[0].mxu0
        %v647 = vadd.f32 %v385, %v646
        %v648 = vpop.f32.mrb[0].mxu0
        %v649 = vadd.f32 %v389, %v648
        %v650 = vpop.f32.mrb[0].mxu0
        %v651 = vadd.f32 %v385, %v650
        %v652 = vpop.f32.mrb[0].mxu0
        %v653 = vadd.f32 %v389, %v652
        %654 = vmatprep.mubr.bf16.mxu0 0
        %655 = vmatmul.mubr.bf16.gmra.mrb[0].mxu0 %v346
        %v656 = vpop.f32.mrb[0].mxu0
        %v657 = vadd.f32 %v385, %v656
        %v658 = vpop.f32.mrb[0].mxu0
        %v659 = vadd.f32 %v389, %v658
        %v660 = vpop.f32.mrb[0].mxu0
        %v661 = vadd.f32 %v385, %v660
        %v662 = vpop.f32.mrb[0].mxu0
        %v663 = vadd.f32 %v389, %v662
        %664 = vmatprep.mubr.bf16.mxu0 0
        %665 = vmatmul.mubr.bf16.gmra.mrb[0].mxu0 %v347
        %v666 = vpop.f32.mrb[0].mxu0
        %v667 = vadd.f32 %v385, %v666
        %v668 = vpop.f32.mrb[0].mxu0
        %v669 = vadd.f32 %v389, %v668
        %v670 = vpop.f32.mrb[0].mxu0
        %v671 = vadd.f32 %v385, %v670
        %v672 = vpop.f32.mrb[0].mxu0
        %v673 = vadd.f32 %v389, %v672
        %674 = vdwg.mxu0
        %675 = vmatprep.subr.bf16.mxu0 %v501
        %676 = vmatpush1.bf16.msra.mxu0 %v500
        %677 = vmatprep.subr.bf16.mxu0 %v505
        %678 = vmatpush1.bf16.msra.mxu0 %v504
        %679 = vmatprep.subr.bf16.mxu0 %v509
        %680 = vmatpush1.bf16.msra.mxu0 %v508
        %681 = vmatprep.subr.bf16.mxu0 %v513
        %682 = vmatpush1.bf16.msra.mxu0 %v512
        %683 = vmatprep.subr.bf16.mxu0 %v517
        %684 = vmatpush1.bf16.msra.mxu0 %v516
        %685 = vmatprep.subr.bf16.mxu0 %v521
        %686 = vmatpush1.bf16.msra.mxu0 %v520
        %687 = vmatprep.subr.bf16.mxu0 %v525
        %688 = vmatpush1.bf16.msra.mxu0 %v524
        %689 = vmatprep.subr.bf16.mxu0 %v529
        %690 = vmatpush1.bf16.msra.mxu0 %v528
        %691 = vmatprep.subr.bf16.mxu0 0
        %692 = vmatpush1.bf16.msra.mxu0 0
        %693 = vmatprep.subr.bf16.mxu0 0
        %694 = vmatpush1.bf16.msra.mxu0 0
        %695 = vmatprep.subr.bf16.mxu0 0
        %696 = vmatpush1.bf16.msra.mxu0 0
        %697 = vmatprep.subr.bf16.mxu0 0
        %698 = vmatpush1.bf16.msra.mxu0 0
        %699 = vmatprep.subr.bf16.mxu0 0
        %700 = vmatpush1.bf16.msra.mxu0 0
        %701 = vmatprep.subr.bf16.mxu0 0
        %702 = vmatpush1.bf16.msra.mxu0 0
        %703 = vmatprep.subr.bf16.mxu0 0
        %704 = vmatpush1.bf16.msra.mxu0 0
        %705 = vmatprep.subr.bf16.mxu0 0
        %706 = vmatpush1.bf16.msra.mxu0 0
        %707 = vmatprep.mubr.bf16.mxu0 0
        %708 = vmatmul.mubr.bf16.gmra.mrb[0].mxu0 %v340
        %v709 = vpop.f32.mrb[0].mxu0
        %v710 = vadd.f32 %v393, %v709
        %v711 = vpop.f32.mrb[0].mxu0
        %v712 = vadd.f32 %v397, %v711
        %v713 = vpop.f32.mrb[0].mxu0
        %v714 = vadd.f32 %v393, %v713
        %v715 = vpop.f32.mrb[0].mxu0
        %v716 = vadd.f32 %v397, %v715
        %717 = vmatprep.mubr.bf16.mxu0 0
        %718 = vmatmul.mubr.bf16.gmra.mrb[0].mxu0 %v341
        %v719 = vpop.f32.mrb[0].mxu0
        %v720 = vadd.f32 %v393, %v719
        %v721 = vpop.f32.mrb[0].mxu0
        %v722 = vadd.f32 %v397, %v721
        %v723 = vpop.f32.mrb[0].mxu0
        %v724 = vadd.f32 %v393, %v723
        %v725 = vpop.f32.mrb[0].mxu0
        %v726 = vadd.f32 %v397, %v725
        %727 = vmatprep.mubr.bf16.mxu0 0
        %728 = vmatmul.mubr.bf16.gmra.mrb[0].mxu0 %v342
        %v729 = vpop.f32.mrb[0].mxu0
        %v730 = vadd.f32 %v393, %v729
        %v731 = vpop.f32.mrb[0].mxu0
        %v732 = vadd.f32 %v397, %v731
        %v733 = vpop.f32.mrb[0].mxu0
        %v734 = vadd.f32 %v393, %v733
        %v735 = vpop.f32.mrb[0].mxu0
        %v736 = vadd.f32 %v397, %v735
        %737 = vmatprep.mubr.bf16.mxu0 0
        %738 = vmatmul.mubr.bf16.gmra.mrb[0].mxu0 %v343
        %v739 = vpop.f32.mrb[0].mxu0
        %v740 = vadd.f32 %v393, %v739
        %v741 = vpop.f32.mrb[0].mxu0
        %v742 = vadd.f32 %v397, %v741
        %v743 = vpop.f32.mrb[0].mxu0
        %v744 = vadd.f32 %v393, %v743
        %v745 = vpop.f32.mrb[0].mxu0
        %v746 = vadd.f32 %v397, %v745
        %747 = vmatprep.mubr.bf16.mxu0 0
        %748 = vmatmul.mubr.bf16.gmra.mrb[0].mxu0 %v344
        %v749 = vpop.f32.mrb[0].mxu0
        %v750 = vadd.f32 %v393, %v749
        %v751 = vpop.f32.mrb[0].mxu0
        %v752 = vadd.f32 %v397, %v751
        %v753 = vpop.f32.mrb[0].mxu0
        %v754 = vadd.f32 %v393, %v753
        %v755 = vpop.f32.mrb[0].mxu0
        %v756 = vadd.f32 %v397, %v755
        %757 = vmatprep.mubr.bf16.mxu0 0
        %758 = vmatmul.mubr.bf16.gmra.mrb[0].mxu0 %v345
        %v759 = vpop.f32.mrb[0].mxu0
        %v760 = vadd.f32 %v393, %v759
        %v761 = vpop.f32.mrb[0].mxu0
        %v762 = vadd.f32 %v397, %v761
        %v763 = vpop.f32.mrb[0].mxu0
        %v764 = vadd.f32 %v393, %v763
        %v765 = vpop.f32.mrb[0].mxu0
        %v766 = vadd.f32 %v397, %v765
        %767 = vmatprep.mubr.bf16.mxu0 0
        %768 = vmatmul.mubr.bf16.gmra.mrb[0].mxu0 %v346
        %v769 = vpop.f32.mrb[0].mxu0
        %v770 = vadd.f32 %v393, %v769
        %v771 = vpop.f32.mrb[0].mxu0
        %v772 = vadd.f32 %v397, %v771
        %v773 = vpop.f32.mrb[0].mxu0
        %v774 = vadd.f32 %v393, %v773
        %v775 = vpop.f32.mrb[0].mxu0
        %v776 = vadd.f32 %v397, %v775
        %777 = vmatprep.mubr.bf16.mxu0 0
        %778 = vmatmul.mubr.bf16.gmra.mrb[0].mxu0 %v347
        %v779 = vpop.f32.mrb[0].mxu0
        %v780 = vadd.f32 %v393, %v779
        %v781 = vpop.f32.mrb[0].mxu0
        %v782 = vadd.f32 %v397, %v781
        %v783 = vpop.f32.mrb[0].mxu0
        %v784 = vadd.f32 %v393, %v783
        %v785 = vpop.f32.mrb[0].mxu0
        %v786 = vadd.f32 %v397, %v785
        %787 = vdwg.mxu0
        %v788 = vxor.u32 %v597, 2147483648
        %v789 = vxor.u32 %v599, 2147483648
        %v790 = vxor.u32 %v710, 2147483648
        %v791 = vxor.u32 %v712, 2147483648
        %v792 = vxor.u32 %v601, 2147483648
        %v793 = vxor.u32 %v603, 2147483648
        %v794 = vxor.u32 %v714, 2147483648
        %v795 = vxor.u32 %v716, 2147483648
        %v796 = vxor.u32 %v607, 2147483648
        %v797 = vxor.u32 %v609, 2147483648
        %v798 = vxor.u32 %v720, 2147483648
        %v799 = vxor.u32 %v722, 2147483648
        %v800 = vxor.u32 %v611, 2147483648
        %v801 = vxor.u32 %v613, 2147483648
        %v802 = vxor.u32 %v724, 2147483648
        %v803 = vxor.u32 %v726, 2147483648
        %v804 = vxor.u32 %v617, 2147483648
        %v805 = vxor.u32 %v619, 2147483648
        %v806 = vxor.u32 %v730, 2147483648
        %v807 = vxor.u32 %v732, 2147483648
        %v808 = vxor.u32 %v621, 2147483648
        %v809 = vxor.u32 %v623, 2147483648
        %v810 = vxor.u32 %v734, 2147483648
        %v811 = vxor.u32 %v736, 2147483648
        %v812 = vxor.u32 %v627, 2147483648
        %v813 = vxor.u32 %v629, 2147483648
        %v814 = vxor.u32 %v740, 2147483648
        %v815 = vxor.u32 %v742, 2147483648
        %v816 = vxor.u32 %v631, 2147483648
        %v817 = vxor.u32 %v633, 2147483648
        %v818 = vxor.u32 %v744, 2147483648
        %v819 = vxor.u32 %v746, 2147483648
        %v820 = vxor.u32 %v637, 2147483648
        %v821 = vxor.u32 %v639, 2147483648
        %v822 = vxor.u32 %v750, 2147483648
        %v823 = vxor.u32 %v752, 2147483648
        %v824 = vxor.u32 %v641, 2147483648
        %v825 = vxor.u32 %v643, 2147483648
        %v826 = vxor.u32 %v754, 2147483648
        %v827 = vxor.u32 %v756, 2147483648
        %v828 = vxor.u32 %v647, 2147483648
        %v829 = vxor.u32 %v649, 2147483648
        %v830 = vxor.u32 %v760, 2147483648
        %v831 = vxor.u32 %v762, 2147483648
        %v832 = vxor.u32 %v651, 2147483648
        %v833 = vxor.u32 %v653, 2147483648
        %v834 = vxor.u32 %v764, 2147483648
        %v835 = vxor.u32 %v766, 2147483648
        %v836 = vxor.u32 %v657, 2147483648
        %v837 = vxor.u32 %v659, 2147483648
        %v838 = vxor.u32 %v770, 2147483648
        %v839 = vxor.u32 %v772, 2147483648
        %v840 = vxor.u32 %v661, 2147483648
        %v841 = vxor.u32 %v663, 2147483648
        %v842 = vxor.u32 %v774, 2147483648
        %v843 = vxor.u32 %v776, 2147483648
        %v844 = vxor.u32 %v667, 2147483648
        %v845 = vxor.u32 %v669, 2147483648
        %v846 = vxor.u32 %v780, 2147483648
        %v847 = vxor.u32 %v782, 2147483648
        %v848 = vxor.u32 %v671, 2147483648
        %v849 = vxor.u32 %v673, 2147483648
        %v850 = vxor.u32 %v784, 2147483648
        %v851 = vxor.u32 %v786, 2147483648
        %v852 = vmul.f32 %v788, 1.442695
        %v853 = vpow.pop %v852
        %v854 = vmul.f32 %v789, 1.442695
        %v855 = vpow.pop %v854
        %v856 = vmul.f32 %v790, 1.442695
        %v857 = vpow.pop %v856
        %v858 = vmul.f32 %v791, 1.442695
        %v859 = vpow.pop %v858
        %v860 = vmul.f32 %v792, 1.442695
        %v861 = vpow.pop %v860
        %v862 = vmul.f32 %v793, 1.442695
        %v863 = vpow.pop %v862
        %v864 = vmul.f32 %v794, 1.442695
        %v865 = vpow.pop %v864
        %v866 = vmul.f32 %v795, 1.442695
        %v867 = vpow.pop %v866
        %v868 = vmul.f32 %v796, 1.442695
        %v869 = vpow.pop %v868
        %v870 = vmul.f32 %v797, 1.442695
        %v871 = vpow.pop %v870
        %v872 = vmul.f32 %v798, 1.442695
        %v873 = vpow.pop %v872
        %v874 = vmul.f32 %v799, 1.442695
        %v875 = vpow.pop %v874
        %v876 = vmul.f32 %v800, 1.442695
        %v877 = vpow.pop %v876
        %v878 = vmul.f32 %v801, 1.442695
        %v879 = vpow.pop %v878
        %v880 = vmul.f32 %v802, 1.442695
        %v881 = vpow.pop %v880
        %v882 = vmul.f32 %v803, 1.442695
        %v883 = vpow.pop %v882
        %v884 = vmul.f32 %v804, 1.442695
        %v885 = vpow.pop %v884
        %v886 = vmul.f32 %v805, 1.442695
        %v887 = vpow.pop %v886
        %v888 = vmul.f32 %v806, 1.442695
        %v889 = vpow.pop %v888
        %v890 = vmul.f32 %v807, 1.442695
        %v891 = vpow.pop %v890
        %v892 = vmul.f32 %v808, 1.442695
        %v893 = vpow.pop %v892
        %v894 = vmul.f32 %v809, 1.442695
        %v895 = vpow.pop %v894
        %v896 = vmul.f32 %v810, 1.442695
        %v897 = vpow.pop %v896
        %v898 = vmul.f32 %v811, 1.442695
        %v899 = vpow.pop %v898
        %v900 = vmul.f32 %v812, 1.442695
        %v901 = vpow.pop %v900
        %v902 = vmul.f32 %v813, 1.442695
        %v903 = vpow.pop %v902
        %v904 = vmul.f32 %v814, 1.442695
        %v905 = vpow.pop %v904
        %v906 = vmul.f32 %v815, 1.442695
        %v907 = vpow.pop %v906
        %v908 = vmul.f32 %v816, 1.442695
        %v909 = vpow.pop %v908
        %v910 = vmul.f32 %v817, 1.442695
        %v911 = vpow.pop %v910
        %v912 = vmul.f32 %v818, 1.442695
        %v913 = vpow.pop %v912
        %v914 = vmul.f32 %v819, 1.442695
        %v915 = vpow.pop %v914
        %v916 = vmul.f32 %v820, 1.442695
        %v917 = vpow.pop %v916
        %v918 = vmul.f32 %v821, 1.442695
        %v919 = vpow.pop %v918
        %v920 = vmul.f32 %v822, 1.442695
        %v921 = vpow.pop %v920
        %v922 = vmul.f32 %v823, 1.442695
        %v923 = vpow.pop %v922
        %v924 = vmul.f32 %v824, 1.442695
        %v925 = vpow.pop %v924
        %v926 = vmul.f32 %v825, 1.442695
        %v927 = vpow.pop %v926
        %v928 = vmul.f32 %v826, 1.442695
        %v929 = vpow.pop %v928
        %v930 = vmul.f32 %v827, 1.442695
        %v931 = vpow.pop %v930
        %v932 = vmul.f32 %v828, 1.442695
        %v933 = vpow.pop %v932
        %v934 = vmul.f32 %v829, 1.442695
        %v935 = vpow.pop %v934
        %v936 = vmul.f32 %v830, 1.442695
        %v937 = vpow.pop %v936
        %v938 = vmul.f32 %v831, 1.442695
        %v939 = vpow.pop %v938
        %v940 = vmul.f32 %v832, 1.442695
        %v941 = vpow.pop %v940
        %v942 = vmul.f32 %v833, 1.442695
        %v943 = vpow.pop %v942
        %v944 = vmul.f32 %v834, 1.442695
        %v945 = vpow.pop %v944
        %v946 = vmul.f32 %v835, 1.442695
        %v947 = vpow.pop %v946
        %v948 = vmul.f32 %v836, 1.442695
        %v949 = vpow.pop %v948
        %v950 = vmul.f32 %v837, 1.442695
        %v951 = vpow.pop %v950
        %v952 = vmul.f32 %v838, 1.442695
        %v953 = vpow.pop %v952
        %v954 = vmul.f32 %v839, 1.442695
        %v955 = vpow.pop %v954
        %v956 = vmul.f32 %v840, 1.442695
        %v957 = vpow.pop %v956
        %v958 = vmul.f32 %v841, 1.442695
        %v959 = vpow.pop %v958
        %v960 = vmul.f32 %v842, 1.442695
        %v961 = vpow.pop %v960
        %v962 = vmul.f32 %v843, 1.442695
        %v963 = vpow.pop %v962
        %v964 = vmul.f32 %v844, 1.442695
        %v965 = vpow.pop %v964
        %v966 = vmul.f32 %v845, 1.442695
        %v967 = vpow.pop %v966
        %v968 = vmul.f32 %v846, 1.442695
        %v969 = vpow.pop %v968
        %v970 = vmul.f32 %v847, 1.442695
        %v971 = vpow.pop %v970
        %v972 = vmul.f32 %v848, 1.442695
        %v973 = vpow.pop %v972
        %v974 = vmul.f32 %v849, 1.442695
        %v975 = vpow.pop %v974
        %v976 = vmul.f32 %v850, 1.442695
        %v977 = vpow.pop %v976
        %v978 = vmul.f32 %v851, 1.442695
        %v979 = vpow.pop %v978
        %v980 = vadd.f32 %v853, 1.0
        %v981 = vadd.f32 %v855, 1.0
        %v982 = vadd.f32 %v857, 1.0
        %v983 = vadd.f32 %v859, 1.0
        %v984 = vadd.f32 %v861, 1.0
        %v985 = vadd.f32 %v863, 1.0
        %v986 = vadd.f32 %v865, 1.0
        %v987 = vadd.f32 %v867, 1.0
        %v988 = vadd.f32 %v869, 1.0
        %v989 = vadd.f32 %v871, 1.0
        %v990 = vadd.f32 %v873, 1.0
        %v991 = vadd.f32 %v875, 1.0
        %v992 = vadd.f32 %v877, 1.0
        %v993 = vadd.f32 %v879, 1.0
        %v994 = vadd.f32 %v881, 1.0
        %v995 = vadd.f32 %v883, 1.0
        %v996 = vadd.f32 %v885, 1.0
        %v997 = vadd.f32 %v887, 1.0
        %v998 = vadd.f32 %v889, 1.0
        %v999 = vadd.f32 %v891, 1.0
        %v1000 = vadd.f32 %v893, 1.0
        %v1001 = vadd.f32 %v895, 1.0
        %v1002 = vadd.f32 %v897, 1.0
        %v1003 = vadd.f32 %v899, 1.0
        %v1004 = vadd.f32 %v901, 1.0
        %v1005 = vadd.f32 %v903, 1.0
        %v1006 = vadd.f32 %v905, 1.0
        %v1007 = vadd.f32 %v907, 1.0
        %v1008 = vadd.f32 %v909, 1.0
        %v1009 = vadd.f32 %v911, 1.0
        %v1010 = vadd.f32 %v913, 1.0
        %v1011 = vadd.f32 %v915, 1.0
        %v1012 = vadd.f32 %v917, 1.0
        %v1013 = vadd.f32 %v919, 1.0
        %v1014 = vadd.f32 %v921, 1.0
        %v1015 = vadd.f32 %v923, 1.0
        %v1016 = vadd.f32 %v925, 1.0
        %v1017 = vadd.f32 %v927, 1.0
        %v1018 = vadd.f32 %v929, 1.0
        %v1019 = vadd.f32 %v931, 1.0
        %v1020 = vadd.f32 %v933, 1.0
        %v1021 = vadd.f32 %v935, 1.0
        %v1022 = vadd.f32 %v937, 1.0
        %v1023 = vadd.f32 %v939, 1.0
        %v1024 = vadd.f32 %v941, 1.0
        %v1025 = vadd.f32 %v943, 1.0
        %v1026 = vadd.f32 %v945, 1.0
        %v1027 = vadd.f32 %v947, 1.0
        %v1028 = vadd.f32 %v949, 1.0
        %v1029 = vadd.f32 %v951, 1.0
        %v1030 = vadd.f32 %v953, 1.0
        %v1031 = vadd.f32 %v955, 1.0
        %v1032 = vadd.f32 %v957, 1.0
        %v1033 = vadd.f32 %v959, 1.0
        %v1034 = vadd.f32 %v961, 1.0
        %v1035 = vadd.f32 %v963, 1.0
        %v1036 = vadd.f32 %v965, 1.0
        %v1037 = vadd.f32 %v967, 1.0
        %v1038 = vadd.f32 %v969, 1.0
        %v1039 = vadd.f32 %v971, 1.0
        %v1040 = vadd.f32 %v973, 1.0
        %v1041 = vadd.f32 %v975, 1.0
        %v1042 = vadd.f32 %v977, 1.0
        %v1043 = vadd.f32 %v979, 1.0
        %v1044 = vrcp.pop %v980
        %v1045 = vmul.f32 1.0, %v1044
        %v1046 = vrcp.pop %v981
        %v1047 = vmul.f32 1.0, %v1046
        %v1048 = vrcp.pop %v982
        %v1049 = vmul.f32 1.0, %v1048
        %v1050 = vrcp.pop %v983
        %v1051 = vmul.f32 1.0, %v1050
        %v1052 = vrcp.pop %v984
        %v1053 = vmul.f32 1.0, %v1052
        %v1054 = vrcp.pop %v985
        %v1055 = vmul.f32 1.0, %v1054
        %v1056 = vrcp.pop %v986
        %v1057 = vmul.f32 1.0, %v1056
        %v1058 = vrcp.pop %v987
        %v1059 = vmul.f32 1.0, %v1058
        %v1060 = vrcp.pop %v988
        %v1061 = vmul.f32 1.0, %v1060
        %v1062 = vrcp.pop %v989
        %v1063 = vmul.f32 1.0, %v1062
        %v1064 = vrcp.pop %v990
        %v1065 = vmul.f32 1.0, %v1064
        %v1066 = vrcp.pop %v991
        %v1067 = vmul.f32 1.0, %v1066
        %v1068 = vrcp.pop %v992
        %v1069 = vmul.f32 1.0, %v1068
        %v1070 = vrcp.pop %v993
        %v1071 = vmul.f32 1.0, %v1070
        %v1072 = vrcp.pop %v994
        %v1073 = vmul.f32 1.0, %v1072
        %v1074 = vrcp.pop %v995
        %v1075 = vmul.f32 1.0, %v1074
        %v1076 = vrcp.pop %v996
        %v1077 = vmul.f32 1.0, %v1076
        %v1078 = vrcp.pop %v997
        %v1079 = vmul.f32 1.0, %v1078
        %v1080 = vrcp.pop %v998
        %v1081 = vmul.f32 1.0, %v1080
        %v1082 = vrcp.pop %v999
        %v1083 = vmul.f32 1.0, %v1082
        %v1084 = vrcp.pop %v1000
        %v1085 = vmul.f32 1.0, %v1084
        %v1086 = vrcp.pop %v1001
        %v1087 = vmul.f32 1.0, %v1086
        %v1088 = vrcp.pop %v1002
        %v1089 = vmul.f32 1.0, %v1088
        %v1090 = vrcp.pop %v1003
        %v1091 = vmul.f32 1.0, %v1090
        %v1092 = vrcp.pop %v1004
        %v1093 = vmul.f32 1.0, %v1092
        %v1094 = vrcp.pop %v1005
        %v1095 = vmul.f32 1.0, %v1094
        %v1096 = vrcp.pop %v1006
        %v1097 = vmul.f32 1.0, %v1096
        %v1098 = vrcp.pop %v1007
        %v1099 = vmul.f32 1.0, %v1098
        %v1100 = vrcp.pop %v1008
        %v1101 = vmul.f32 1.0, %v1100
        %v1102 = vrcp.pop %v1009
        %v1103 = vmul.f32 1.0, %v1102
        %v1104 = vrcp.pop %v1010
        %v1105 = vmul.f32 1.0, %v1104
        %v1106 = vrcp.pop %v1011
        %v1107 = vmul.f32 1.0, %v1106
        %v1108 = vrcp.pop %v1012
        %v1109 = vmul.f32 1.0, %v1108
        %v1110 = vrcp.pop %v1013
        %v1111 = vmul.f32 1.0, %v1110
        %v1112 = vrcp.pop %v1014
        %v1113 = vmul.f32 1.0, %v1112
        %v1114 = vrcp.pop %v1015
        %v1115 = vmul.f32 1.0, %v1114
        %v1116 = vrcp.pop %v1016
        %v1117 = vmul.f32 1.0, %v1116
        %v1118 = vrcp.pop %v1017
        %v1119 = vmul.f32 1.0, %v1118
        %v1120 = vrcp.pop %v1018
        %v1121 = vmul.f32 1.0, %v1120
        %v1122 = vrcp.pop %v1019
        %v1123 = vmul.f32 1.0, %v1122
        %v1124 = vrcp.pop %v1020
        %v1125 = vmul.f32 1.0, %v1124
        %v1126 = vrcp.pop %v1021
        %v1127 = vmul.f32 1.0, %v1126
        %v1128 = vrcp.pop %v1022
        %v1129 = vmul.f32 1.0, %v1128
        %v1130 = vrcp.pop %v1023
        %v1131 = vmul.f32 1.0, %v1130
        %v1132 = vrcp.pop %v1024
        %v1133 = vmul.f32 1.0, %v1132
        %v1134 = vrcp.pop %v1025
        %v1135 = vmul.f32 1.0, %v1134
        %v1136 = vrcp.pop %v1026
        %v1137 = vmul.f32 1.0, %v1136
        %v1138 = vrcp.pop %v1027
        %v1139 = vmul.f32 1.0, %v1138
        %v1140 = vrcp.pop %v1028
        %v1141 = vmul.f32 1.0, %v1140
        %v1142 = vrcp.pop %v1029
        %v1143 = vmul.f32 1.0, %v1142
        %v1144 = vrcp.pop %v1030
        %v1145 = vmul.f32 1.0, %v1144
        %v1146 = vrcp.pop %v1031
        %v1147 = vmul.f32 1.0, %v1146
        %v1148 = vrcp.pop %v1032
        %v1149 = vmul.f32 1.0, %v1148
        %v1150 = vrcp.pop %v1033
        %v1151 = vmul.f32 1.0, %v1150
        %v1152 = vrcp.pop %v1034
        %v1153 = vmul.f32 1.0, %v1152
        %v1154 = vrcp.pop %v1035
        %v1155 = vmul.f32 1.0, %v1154
        %v1156 = vrcp.pop %v1036
        %v1157 = vmul.f32 1.0, %v1156
        %v1158 = vrcp.pop %v1037
        %v1159 = vmul.f32 1.0, %v1158
        %v1160 = vrcp.pop %v1038
        %v1161 = vmul.f32 1.0, %v1160
        %v1162 = vrcp.pop %v1039
        %v1163 = vmul.f32 1.0, %v1162
        %v1164 = vrcp.pop %v1040
        %v1165 = vmul.f32 1.0, %v1164
        %v1166 = vrcp.pop %v1041
        %v1167 = vmul.f32 1.0, %v1166
        %v1168 = vrcp.pop %v1042
        %v1169 = vmul.f32 1.0, %v1168
        %v1170 = vrcp.pop %v1043
        %v1171 = vmul.f32 1.0, %v1170
        %v1172 = vmul.f32 %v597, %v1045
        %v1173 = vmul.f32 %v599, %v1047
        %v1174 = vmul.f32 %v710, %v1049
        %v1175 = vmul.f32 %v712, %v1051
        %v1176 = vmul.f32 %v601, %v1053
        %v1177 = vmul.f32 %v603, %v1055
        %v1178 = vmul.f32 %v714, %v1057
        %v1179 = vmul.f32 %v716, %v1059
        %v1180 = vmul.f32 %v607, %v1061
        %v1181 = vmul.f32 %v609, %v1063
        %v1182 = vmul.f32 %v720, %v1065
        %v1183 = vmul.f32 %v722, %v1067
        %v1184 = vmul.f32 %v611, %v1069
        %v1185 = vmul.f32 %v613, %v1071
        %v1186 = vmul.f32 %v724, %v1073
        %v1187 = vmul.f32 %v726, %v1075
        %v1188 = vmul.f32 %v617, %v1077
        %v1189 = vmul.f32 %v619, %v1079
        %v1190 = vmul.f32 %v730, %v1081
        %v1191 = vmul.f32 %v732, %v1083
        %v1192 = vmul.f32 %v621, %v1085
        %v1193 = vmul.f32 %v623, %v1087
        %v1194 = vmul.f32 %v734, %v1089
        %v1195 = vmul.f32 %v736, %v1091
        %v1196 = vmul.f32 %v627, %v1093
        %v1197 = vmul.f32 %v629, %v1095
        %v1198 = vmul.f32 %v740, %v1097
        %v1199 = vmul.f32 %v742, %v1099
        %v1200 = vmul.f32 %v631, %v1101
        %v1201 = vmul.f32 %v633, %v1103
        %v1202 = vmul.f32 %v744, %v1105
        %v1203 = vmul.f32 %v746, %v1107
        %v1204 = vmul.f32 %v637, %v1109
        %v1205 = vmul.f32 %v639, %v1111
        %v1206 = vmul.f32 %v750, %v1113
        %v1207 = vmul.f32 %v752, %v1115
        %v1208 = vmul.f32 %v641, %v1117
        %v1209 = vmul.f32 %v643, %v1119
        %v1210 = vmul.f32 %v754, %v1121
        %v1211 = vmul.f32 %v756, %v1123
        %v1212 = vmul.f32 %v647, %v1125
        %v1213 = vmul.f32 %v649, %v1127
        %v1214 = vmul.f32 %v760, %v1129
        %v1215 = vmul.f32 %v762, %v1131
        %v1216 = vmul.f32 %v651, %v1133
        %v1217 = vmul.f32 %v653, %v1135
        %v1218 = vmul.f32 %v764, %v1137
        %v1219 = vmul.f32 %v766, %v1139
        %v1220 = vmul.f32 %v657, %v1141
        %v1221 = vmul.f32 %v659, %v1143
        %v1222 = vmul.f32 %v770, %v1145
        %v1223 = vmul.f32 %v772, %v1147
        %v1224 = vmul.f32 %v661, %v1149
        %v1225 = vmul.f32 %v663, %v1151
        %v1226 = vmul.f32 %v774, %v1153
        %v1227 = vmul.f32 %v776, %v1155
        %v1228 = vmul.f32 %v667, %v1157
        %v1229 = vmul.f32 %v669, %v1159
        %v1230 = vmul.f32 %v780, %v1161
        %v1231 = vmul.f32 %v782, %v1163
        %v1232 = vmul.f32 %v671, %v1165
        %v1233 = vmul.f32 %v673, %v1167
        %v1234 = vmul.f32 %v784, %v1169
        %v1235 = vmul.f32 %v786, %v1171
        %v1236 = vpack.c.bf16 %v1176, %v1172
        %v1237 = vpack.c.bf16 %v1177, %v1173
        %v1238 = vpack.c.bf16 %v1178, %v1174
        %v1239 = vpack.c.bf16 %v1179, %v1175
        %v1240 = vpack.c.bf16 %v1184, %v1180
        %v1241 = vpack.c.bf16 %v1185, %v1181
        %v1242 = vpack.c.bf16 %v1186, %v1182
        %v1243 = vpack.c.bf16 %v1187, %v1183
        %v1244 = vpack.c.bf16 %v1192, %v1188
        %v1245 = vpack.c.bf16 %v1193, %v1189
        %v1246 = vpack.c.bf16 %v1194, %v1190
        %v1247 = vpack.c.bf16 %v1195, %v1191
        %v1248 = vpack.c.bf16 %v1200, %v1196
        %v1249 = vpack.c.bf16 %v1201, %v1197
        %v1250 = vpack.c.bf16 %v1202, %v1198
        %v1251 = vpack.c.bf16 %v1203, %v1199
        %v1252 = vpack.c.bf16 %v1208, %v1204
        %v1253 = vpack.c.bf16 %v1209, %v1205
        %v1254 = vpack.c.bf16 %v1210, %v1206
        %v1255 = vpack.c.bf16 %v1211, %v1207
        %v1256 = vpack.c.bf16 %v1216, %v1212
        %v1257 = vpack.c.bf16 %v1217, %v1213
        %v1258 = vpack.c.bf16 %v1218, %v1214
        %v1259 = vpack.c.bf16 %v1219, %v1215
        %v1260 = vpack.c.bf16 %v1224, %v1220
        %v1261 = vpack.c.bf16 %v1225, %v1221
        %v1262 = vpack.c.bf16 %v1226, %v1222
        %v1263 = vpack.c.bf16 %v1227, %v1223
        %v1264 = vpack.c.bf16 %v1232, %v1228
        %v1265 = vpack.c.bf16 %v1233, %v1229
        %v1266 = vpack.c.bf16 %v1234, %v1230
        %v1267 = vpack.c.bf16 %v1235, %v1231
        %v1268 = vld [vmem:[#allocation7] sm:$0xf]
        %v1269 = vld [vmem:[#allocation7 + $0x4] sm:$0xf]
        %v1270 = vld [vmem:[#allocation7 + $0x8] sm:$0xf]
        %v1271 = vld [vmem:[#allocation7 + $0xc] sm:$0xf]
        %v1272 = vld [vmem:[#allocation7 + $0x10] sm:$0xf]
        %v1273 = vld [vmem:[#allocation7 + $0x14] sm:$0xf]
        %v1274 = vld [vmem:[#allocation7 + $0x18] sm:$0xf]
        %v1275 = vld [vmem:[#allocation7 + $0x1c] sm:$0xf]
        %v1276 = vld [vmem:[#allocation7 + $0x20] sm:$0xf]
        %v1277 = vld [vmem:[#allocation7 + $0x24] sm:$0xf]
        %v1278 = vld [vmem:[#allocation7 + $0x28] sm:$0xf]
        %v1279 = vld [vmem:[#allocation7 + $0x2c] sm:$0xf]
        %v1280 = vld [vmem:[#allocation7 + $0x30] sm:$0xf]
        %v1281 = vld [vmem:[#allocation7 + $0x34] sm:$0xf]
        %v1282 = vld [vmem:[#allocation7 + $0x38] sm:$0xf]
        %v1283 = vld [vmem:[#allocation7 + $0x3c] sm:$0xf]
        %v1284 = vld [vmem:[#allocation7 + $0x40] sm:$0xf]
        %v1285 = vld [vmem:[#allocation7 + $0x44] sm:$0xf]
        %v1286 = vld [vmem:[#allocation7 + $0x48] sm:$0xf]
        %v1287 = vld [vmem:[#allocation7 + $0x4c] sm:$0xf]
        %v1288 = vld [vmem:[#allocation7 + $0x50] sm:$0xf]
        %v1289 = vld [vmem:[#allocation7 + $0x54] sm:$0xf]
        %v1290 = vld [vmem:[#allocation7 + $0x58] sm:$0xf]
        %v1291 = vld [vmem:[#allocation7 + $0x5c] sm:$0xf]
        %v1292 = vld [vmem:[#allocation7 + $0x60] sm:$0xf]
        %v1293 = vld [vmem:[#allocation7 + $0x64] sm:$0xf]
        %v1294 = vld [vmem:[#allocation7 + $0x68] sm:$0xf]
        %v1295 = vld [vmem:[#allocation7 + $0x6c] sm:$0xf]
        %v1296 = vld [vmem:[#allocation7 + $0x70] sm:$0xf]
        %v1297 = vld [vmem:[#allocation7 + $0x74] sm:$0xf]
        %v1298 = vld [vmem:[#allocation7 + $0x78] sm:$0xf]
        %v1299 = vld [vmem:[#allocation7 + $0x7c] sm:$0xf]
        %v1300 = vld [vmem:[#allocation7 + $0x80] sm:$0xf]
        %v1301 = vld [vmem:[#allocation7 + $0x84] sm:$0xf]
        %v1302 = vld [vmem:[#allocation7 + $0x88] sm:$0xf]
        %v1303 = vld [vmem:[#allocation7 + $0x8c] sm:$0xf]
        %v1304 = vld [vmem:[#allocation7 + $0x90] sm:$0xf]
        %v1305 = vld [vmem:[#allocation7 + $0x94] sm:$0xf]
        %v1306 = vld [vmem:[#allocation7 + $0x98] sm:$0xf]
        %v1307 = vld [vmem:[#allocation7 + $0x9c] sm:$0xf]
        %v1308 = vld [vmem:[#allocation7 + $0xa0] sm:$0xf]
        %v1309 = vld [vmem:[#allocation7 + $0xa4] sm:$0xf]
        %v1310 = vld [vmem:[#allocation7 + $0xa8] sm:$0xf]
        %v1311 = vld [vmem:[#allocation7 + $0xac] sm:$0xf]
        %v1312 = vld [vmem:[#allocation7 + $0xb0] sm:$0xf]
        %v1313 = vld [vmem:[#allocation7 + $0xb4] sm:$0xf]
        %v1314 = vld [vmem:[#allocation7 + $0xb8] sm:$0xf]
        %v1315 = vld [vmem:[#allocation7 + $0xbc] sm:$0xf]
        %v1316 = vld [vmem:[#allocation7 + $0xc0] sm:$0xf]
        %v1317 = vld [vmem:[#allocation7 + $0xc4] sm:$0xf]
        %v1318 = vld [vmem:[#allocation7 + $0xc8] sm:$0xf]
        %v1319 = vld [vmem:[#allocation7 + $0xcc] sm:$0xf]
        %v1320 = vld [vmem:[#allocation7 + $0xd0] sm:$0xf]
        %v1321 = vld [vmem:[#allocation7 + $0xd4] sm:$0xf]
        %v1322 = vld [vmem:[#allocation7 + $0xd8] sm:$0xf]
        %v1323 = vld [vmem:[#allocation7 + $0xdc] sm:$0xf]
        %v1324 = vld [vmem:[#allocation7 + $0xe0] sm:$0xf]
        %v1325 = vld [vmem:[#allocation7 + $0xe4] sm:$0xf]
        %v1326 = vld [vmem:[#allocation7 + $0xe8] sm:$0xf]
        %v1327 = vld [vmem:[#allocation7 + $0xec] sm:$0xf]
        %v1328 = vld [vmem:[#allocation7 + $0xf0] sm:$0xf]
        %v1329 = vld [vmem:[#allocation7 + $0xf4] sm:$0xf]
        %v1330 = vld [vmem:[#allocation7 + $0xf8] sm:$0xf]
        %v1331 = vld [vmem:[#allocation7 + $0xfc] sm:$0xf]
        %v1396 = vunpack.c.l.b16 %v1268
        %v1397 = vunpack.c.l.b16 %v1269
        %v1398 = vunpack.c.l.b16 %v1270
        %v1399 = vunpack.c.l.b16 %v1271
        %v1400 = vunpack.c.l.b16 %v1272
        %v1401 = vunpack.c.l.b16 %v1273
        %v1402 = vunpack.c.l.b16 %v1274
        %v1403 = vunpack.c.l.b16 %v1275
        %v1404 = vunpack.c.l.b16 %v1276
        %v1405 = vunpack.c.l.b16 %v1277
        %v1406 = vunpack.c.l.b16 %v1278
        %v1407 = vunpack.c.l.b16 %v1279
        %v1408 = vunpack.c.l.b16 %v1280
        %v1409 = vunpack.c.l.b16 %v1281
        %v1410 = vunpack.c.l.b16 %v1282
        %v1411 = vunpack.c.l.b16 %v1283
        %v1412 = vunpack.c.l.b16 %v1284
        %v1413 = vunpack.c.l.b16 %v1285
        %v1414 = vunpack.c.l.b16 %v1286
        %v1415 = vunpack.c.l.b16 %v1287
        %v1416 = vunpack.c.l.b16 %v1288
        %v1417 = vunpack.c.l.b16 %v1289
        %v1418 = vunpack.c.l.b16 %v1290
        %v1419 = vunpack.c.l.b16 %v1291
        %v1420 = vunpack.c.l.b16 %v1292
        %v1421 = vunpack.c.l.b16 %v1293
        %v1422 = vunpack.c.l.b16 %v1294
        %v1423 = vunpack.c.l.b16 %v1295
        %v1424 = vunpack.c.l.b16 %v1296
        %v1425 = vunpack.c.l.b16 %v1297
        %v1426 = vunpack.c.l.b16 %v1298
        %v1427 = vunpack.c.l.b16 %v1299
        %v1428 = vunpack.c.l.b16 %v1300
        %v1429 = vunpack.c.l.b16 %v1301
        %v1430 = vunpack.c.l.b16 %v1302
        %v1431 = vunpack.c.l.b16 %v1303
        %v1432 = vunpack.c.l.b16 %v1304
        %v1433 = vunpack.c.l.b16 %v1305
        %v1434 = vunpack.c.l.b16 %v1306
        %v1435 = vunpack.c.l.b16 %v1307
        %v1436 = vunpack.c.l.b16 %v1308
        %v1437 = vunpack.c.l.b16 %v1309
        %v1438 = vunpack.c.l.b16 %v1310
        %v1439 = vunpack.c.l.b16 %v1311
        %v1440 = vunpack.c.l.b16 %v1312
        %v1441 = vunpack.c.l.b16 %v1313
        %v1442 = vunpack.c.l.b16 %v1314
        %v1443 = vunpack.c.l.b16 %v1315
        %v1444 = vunpack.c.l.b16 %v1316
        %v1445 = vunpack.c.l.b16 %v1317
        %v1446 = vunpack.c.l.b16 %v1318
        %v1447 = vunpack.c.l.b16 %v1319
        %v1448 = vunpack.c.l.b16 %v1320
        %v1449 = vunpack.c.l.b16 %v1321
        %v1450 = vunpack.c.l.b16 %v1322
        %v1451 = vunpack.c.l.b16 %v1323
        %v1452 = vunpack.c.l.b16 %v1324
        %v1453 = vunpack.c.l.b16 %v1325
        %v1454 = vunpack.c.l.b16 %v1326
        %v1455 = vunpack.c.l.b16 %v1327
        %v1456 = vunpack.c.l.b16 %v1328
        %v1457 = vunpack.c.l.b16 %v1329
        %v1458 = vunpack.c.l.b16 %v1330
        %v1459 = vunpack.c.l.b16 %v1331
        %v1460 = vpack.c.b16 %v1397, %v1396
        %v1461 = vpack.c.b16 %v1399, %v1398
        %v1462 = vpack.c.b16 %v1401, %v1400
        %v1463 = vpack.c.b16 %v1403, %v1402
        %v1464 = vpack.c.b16 %v1405, %v1404
        %v1465 = vpack.c.b16 %v1407, %v1406
        %v1466 = vpack.c.b16 %v1409, %v1408
        %v1467 = vpack.c.b16 %v1411, %v1410
        %v1468 = vpack.c.b16 %v1413, %v1412
        %v1469 = vpack.c.b16 %v1415, %v1414
        %v1470 = vpack.c.b16 %v1417, %v1416
        %v1471 = vpack.c.b16 %v1419, %v1418
        %v1472 = vpack.c.b16 %v1421, %v1420
        %v1473 = vpack.c.b16 %v1423, %v1422
        %v1474 = vpack.c.b16 %v1425, %v1424
        %v1475 = vpack.c.b16 %v1427, %v1426
        %v1476 = vpack.c.b16 %v1429, %v1428
        %v1477 = vpack.c.b16 %v1431, %v1430
        %v1478 = vpack.c.b16 %v1433, %v1432
        %v1479 = vpack.c.b16 %v1435, %v1434
        %v1480 = vpack.c.b16 %v1437, %v1436
        %v1481 = vpack.c.b16 %v1439, %v1438
        %v1482 = vpack.c.b16 %v1441, %v1440
        %v1483 = vpack.c.b16 %v1443, %v1442
        %v1484 = vpack.c.b16 %v1445, %v1444
        %v1485 = vpack.c.b16 %v1447, %v1446
        %v1486 = vpack.c.b16 %v1449, %v1448
        %v1487 = vpack.c.b16 %v1451, %v1450
        %v1488 = vpack.c.b16 %v1453, %v1452
        %v1489 = vpack.c.b16 %v1455, %v1454
        %v1490 = vpack.c.b16 %v1457, %v1456
        %v1491 = vpack.c.b16 %v1459, %v1458
        %1524 = vmatprep.subr.bf16.mxu0 0
        %1525 = vmatpush1.bf16.msra.mxu0 %v1460
        %1526 = vmatprep.subr.bf16.mxu0 0
        %1527 = vmatpush1.bf16.msra.mxu0 %v1461
        %1528 = vmatprep.subr.bf16.mxu0 0
        %1529 = vmatpush1.bf16.msra.mxu0 %v1462
        %1530 = vmatprep.subr.bf16.mxu0 0
        %1531 = vmatpush1.bf16.msra.mxu0 %v1463
        %1532 = vmatprep.subr.bf16.mxu0 0
        %1533 = vmatpush1.bf16.msra.mxu0 %v1464
        %1534 = vmatprep.subr.bf16.mxu0 0
        %1535 = vmatpush1.bf16.msra.mxu0 %v1465
        %1536 = vmatprep.subr.bf16.mxu0 0
        %1537 = vmatpush1.bf16.msra.mxu0 %v1466
        %1538 = vmatprep.subr.bf16.mxu0 0
        %1539 = vmatpush1.bf16.msra.mxu0 %v1467
        %1540 = vmatprep.subr.bf16.mxu0 0
        %1541 = vmatpush1.bf16.msra.mxu0 %v1468
        %1542 = vmatprep.subr.bf16.mxu0 0
        %1543 = vmatpush1.bf16.msra.mxu0 %v1469
        %1544 = vmatprep.subr.bf16.mxu0 0
        %1545 = vmatpush1.bf16.msra.mxu0 %v1470
        %1546 = vmatprep.subr.bf16.mxu0 0
        %1547 = vmatpush1.bf16.msra.mxu0 %v1471
        %1548 = vmatprep.subr.bf16.mxu0 0
        %1549 = vmatpush1.bf16.msra.mxu0 %v1472
        %1550 = vmatprep.subr.bf16.mxu0 0
        %1551 = vmatpush1.bf16.msra.mxu0 %v1473
        %1552 = vmatprep.subr.bf16.mxu0 0
        %1553 = vmatpush1.bf16.msra.mxu0 %v1474
        %1554 = vmatprep.subr.bf16.mxu0 0
        %1555 = vmatpush1.bf16.msra.mxu0 %v1475
        %1556 = vmatprep.mubr.bf16.mxu0 %v1237
        %1557 = vmatmul.mubr.bf16.gmra.mrb[0].mxu0 %v1236
        %v1558 = vpop.f32.mrb[0].mxu0
        %v1559 = vadd.f32 0.0, %v1558
        %v1560 = vpop.f32.mrb[0].mxu0
        %v1561 = vpop.f32.mrb[0].mxu0
        %v1562 = vadd.f32 0.0, %v1561
        %v1563 = vpop.f32.mrb[0].mxu0
        %1564 = vmatprep.mubr.bf16.mxu0 %v1241
        %1565 = vmatmul.mubr.bf16.gmra.mrb[0].mxu0 %v1240
        %v1566 = vpop.f32.mrb[0].mxu0
        %v1567 = vadd.f32 0.0, %v1566
        %v1568 = vpop.f32.mrb[0].mxu0
        %v1569 = vpop.f32.mrb[0].mxu0
        %v1570 = vadd.f32 0.0, %v1569
        %v1571 = vpop.f32.mrb[0].mxu0
        %1572 = vmatprep.mubr.bf16.mxu0 %v1245
        %1573 = vmatmul.mubr.bf16.gmra.mrb[0].mxu0 %v1244
        %v1574 = vpop.f32.mrb[0].mxu0
        %v1575 = vadd.f32 0.0, %v1574
        %v1576 = vpop.f32.mrb[0].mxu0
        %v1577 = vpop.f32.mrb[0].mxu0
        %v1578 = vadd.f32 0.0, %v1577
        %v1579 = vpop.f32.mrb[0].mxu0
        %1580 = vmatprep.mubr.bf16.mxu0 %v1249
        %1581 = vmatmul.mubr.bf16.gmra.mrb[0].mxu0 %v1248
        %v1582 = vpop.f32.mrb[0].mxu0
        %v1583 = vadd.f32 0.0, %v1582
        %v1584 = vpop.f32.mrb[0].mxu0
        %v1585 = vpop.f32.mrb[0].mxu0
        %v1586 = vadd.f32 0.0, %v1585
        %v1587 = vpop.f32.mrb[0].mxu0
        %1588 = vmatprep.mubr.bf16.mxu0 %v1253
        %1589 = vmatmul.mubr.bf16.gmra.mrb[0].mxu0 %v1252
        %v1590 = vpop.f32.mrb[0].mxu0
        %v1591 = vadd.f32 0.0, %v1590
        %v1592 = vpop.f32.mrb[0].mxu0
        %v1593 = vpop.f32.mrb[0].mxu0
        %v1594 = vadd.f32 0.0, %v1593
        %v1595 = vpop.f32.mrb[0].mxu0
        %1596 = vmatprep.mubr.bf16.mxu0 %v1257
        %1597 = vmatmul.mubr.bf16.gmra.mrb[0].mxu0 %v1256
        %v1598 = vpop.f32.mrb[0].mxu0
        %v1599 = vadd.f32 0.0, %v1598
        %v1600 = vpop.f32.mrb[0].mxu0
        %v1601 = vpop.f32.mrb[0].mxu0
        %v1602 = vadd.f32 0.0, %v1601
        %v1603 = vpop.f32.mrb[0].mxu0
        %1604 = vmatprep.mubr.bf16.mxu0 %v1261
        %1605 = vmatmul.mubr.bf16.gmra.mrb[0].mxu0 %v1260
        %v1606 = vpop.f32.mrb[0].mxu0
        %v1607 = vadd.f32 0.0, %v1606
        %v1608 = vpop.f32.mrb[0].mxu0
        %v1609 = vpop.f32.mrb[0].mxu0
        %v1610 = vadd.f32 0.0, %v1609
        %v1611 = vpop.f32.mrb[0].mxu0
        %1612 = vmatprep.mubr.bf16.mxu0 %v1265
        %1613 = vmatmul.mubr.bf16.gmra.mrb[0].mxu0 %v1264
        %v1614 = vpop.f32.mrb[0].mxu0
        %v1615 = vadd.f32 0.0, %v1614
        %v1616 = vpop.f32.mrb[0].mxu0
        %v1617 = vpop.f32.mrb[0].mxu0
        %v1618 = vadd.f32 0.0, %v1617
        %v1619 = vpop.f32.mrb[0].mxu0
        %1620 = vdwg.mxu0
        %1621 = vmatprep.subr.bf16.mxu0 0
        %1622 = vmatpush1.bf16.msra.mxu0 %v1476
        %1623 = vmatprep.subr.bf16.mxu0 0
        %1624 = vmatpush1.bf16.msra.mxu0 %v1477
        %1625 = vmatprep.subr.bf16.mxu0 0
        %1626 = vmatpush1.bf16.msra.mxu0 %v1478
        %1627 = vmatprep.subr.bf16.mxu0 0
        %1628 = vmatpush1.bf16.msra.mxu0 %v1479
        %1629 = vmatprep.subr.bf16.mxu0 0
        %1630 = vmatpush1.bf16.msra.mxu0 %v1480
        %1631 = vmatprep.subr.bf16.mxu0 0
        %1632 = vmatpush1.bf16.msra.mxu0 %v1481
        %1633 = vmatprep.subr.bf16.mxu0 0
        %1634 = vmatpush1.bf16.msra.mxu0 %v1482
        %1635 = vmatprep.subr.bf16.mxu0 0
        %1636 = vmatpush1.bf16.msra.mxu0 %v1483
        %1637 = vmatprep.subr.bf16.mxu0 0
        %1638 = vmatpush1.bf16.msra.mxu0 %v1484
        %1639 = vmatprep.subr.bf16.mxu0 0
        %1640 = vmatpush1.bf16.msra.mxu0 %v1485
        %1641 = vmatprep.subr.bf16.mxu0 0
        %1642 = vmatpush1.bf16.msra.mxu0 %v1486
        %1643 = vmatprep.subr.bf16.mxu0 0
        %1644 = vmatpush1.bf16.msra.mxu0 %v1487
        %1645 = vmatprep.subr.bf16.mxu0 0
        %1646 = vmatpush1.bf16.msra.mxu0 %v1488
        %1647 = vmatprep.subr.bf16.mxu0 0
        %1648 = vmatpush1.bf16.msra.mxu0 %v1489
        %1649 = vmatprep.subr.bf16.mxu0 0
        %1650 = vmatpush1.bf16.msra.mxu0 %v1490
        %1651 = vmatprep.subr.bf16.mxu0 0
        %1652 = vmatpush1.bf16.msra.mxu0 %v1491
        %1653 = vmatprep.mubr.bf16.mxu0 %v1239
        %1654 = vmatmul.mubr.bf16.gmra.mrb[0].mxu0 %v1238
        %v1655 = vpop.f32.mrb[0].mxu0
        %v1656 = vadd.f32 %v1559, %v1655
        %v1657 = vpop.f32.mrb[0].mxu0
        %v1658 = vpop.f32.mrb[0].mxu0
        %v1659 = vadd.f32 %v1562, %v1658
        %v1660 = vpop.f32.mrb[0].mxu0
        %1661 = vmatprep.mubr.bf16.mxu0 %v1243
        %1662 = vmatmul.mubr.bf16.gmra.mrb[0].mxu0 %v1242
        %v1663 = vpop.f32.mrb[0].mxu0
        %v1664 = vadd.f32 %v1567, %v1663
        %v1665 = vpop.f32.mrb[0].mxu0
        %v1666 = vpop.f32.mrb[0].mxu0
        %v1667 = vadd.f32 %v1570, %v1666
        %v1668 = vpop.f32.mrb[0].mxu0
        %1669 = vmatprep.mubr.bf16.mxu0 %v1247
        %1670 = vmatmul.mubr.bf16.gmra.mrb[0].mxu0 %v1246
        %v1671 = vpop.f32.mrb[0].mxu0
        %v1672 = vadd.f32 %v1575, %v1671
        %v1673 = vpop.f32.mrb[0].mxu0
        %v1674 = vpop.f32.mrb[0].mxu0
        %v1675 = vadd.f32 %v1578, %v1674
        %v1676 = vpop.f32.mrb[0].mxu0
        %1677 = vmatprep.mubr.bf16.mxu0 %v1251
        %1678 = vmatmul.mubr.bf16.gmra.mrb[0].mxu0 %v1250
        %v1679 = vpop.f32.mrb[0].mxu0
        %v1680 = vadd.f32 %v1583, %v1679
        %v1681 = vpop.f32.mrb[0].mxu0
        %v1682 = vpop.f32.mrb[0].mxu0
        %v1683 = vadd.f32 %v1586, %v1682
        %v1684 = vpop.f32.mrb[0].mxu0
        %1685 = vmatprep.mubr.bf16.mxu0 %v1255
        %1686 = vmatmul.mubr.bf16.gmra.mrb[0].mxu0 %v1254
        %v1687 = vpop.f32.mrb[0].mxu0
        %v1688 = vadd.f32 %v1591, %v1687
        %v1689 = vpop.f32.mrb[0].mxu0
        %v1690 = vpop.f32.mrb[0].mxu0
        %v1691 = vadd.f32 %v1594, %v1690
        %v1692 = vpop.f32.mrb[0].mxu0
        %1693 = vmatprep.mubr.bf16.mxu0 %v1259
        %1694 = vmatmul.mubr.bf16.gmra.mrb[0].mxu0 %v1258
        %v1695 = vpop.f32.mrb[0].mxu0
        %v1696 = vadd.f32 %v1599, %v1695
        %v1697 = vpop.f32.mrb[0].mxu0
        %v1698 = vpop.f32.mrb[0].mxu0
        %v1699 = vadd.f32 %v1602, %v1698
        %v1700 = vpop.f32.mrb[0].mxu0
        %1701 = vmatprep.mubr.bf16.mxu0 %v1263
        %1702 = vmatmul.mubr.bf16.gmra.mrb[0].mxu0 %v1262
        %v1703 = vpop.f32.mrb[0].mxu0
        %v1704 = vadd.f32 %v1607, %v1703
        %v1705 = vpop.f32.mrb[0].mxu0
        %v1706 = vpop.f32.mrb[0].mxu0
        %v1707 = vadd.f32 %v1610, %v1706
        %v1708 = vpop.f32.mrb[0].mxu0
        %1709 = vmatprep.mubr.bf16.mxu0 %v1267
        %1710 = vmatmul.mubr.bf16.gmra.mrb[0].mxu0 %v1266
        %v1711 = vpop.f32.mrb[0].mxu0
        %v1712 = vadd.f32 %v1615, %v1711
        %v1713 = vpop.f32.mrb[0].mxu0
        %v1714 = vpop.f32.mrb[0].mxu0
        %v1715 = vadd.f32 %v1618, %v1714
        %v1716 = vpop.f32.mrb[0].mxu0
        %1717 = vdwg.mxu0
        %p1718 = scmp.eq.s32.totalorder %s28, 0
        // Predicated region
        $region53: #{feed_forward_module.1} parent=39 // pred_check
          %p1719 = pneg %p1718
        $region54: #{feed_forward_module.1} parent=39 // pred_check_branch
          %1721 = sbr.rel (%p1719) target = $region56
        $region55: #{feed_forward_module.1} parent=39 // pred_region
          %v1722 = vld [vmem:[%s4] sm:$0x1]
          %v1724 = vlaneseq
          %v1725 = vshrl.u32 %v1724, 7
          %v1726 = vsub.s32 0, %v1725
          %v1727 = vrot.slane %v1722, %v1726
          %v1729 = vadd.f32 %v1656, %v1727
          %v1730 = vadd.f32 %v1659, %v1727
          %v1731 = vadd.f32 %v1664, %v1727
          %v1732 = vadd.f32 %v1667, %v1727
          %v1733 = vadd.f32 %v1672, %v1727
          %v1734 = vadd.f32 %v1675, %v1727
          %v1735 = vadd.f32 %v1680, %v1727
          %v1736 = vadd.f32 %v1683, %v1727
          %v1737 = vadd.f32 %v1688, %v1727
          %v1738 = vadd.f32 %v1691, %v1727
          %v1739 = vadd.f32 %v1696, %v1727
          %v1740 = vadd.f32 %v1699, %v1727
          %v1741 = vadd.f32 %v1704, %v1727
          %v1742 = vadd.f32 %v1707, %v1727
          %v1743 = vadd.f32 %v1712, %v1727
          %v1744 = vadd.f32 %v1715, %v1727
          %1745 = vst [vmem:[%s313] sm:$0xff] %v1729
          %1746 = vst [vmem:[%s313 + $0x8] sm:$0xff] %v1730
          %1747 = vst [vmem:[%s313 + $0x10] sm:$0xff] %v1731
          %1748 = vst [vmem:[%s313 + $0x18] sm:$0xff] %v1732
          %1749 = vst [vmem:[%s313 + $0x20] sm:$0xff] %v1733
          %1750 = vst [vmem:[%s313 + $0x28] sm:$0xff] %v1734
          %1751 = vst [vmem:[%s313 + $0x30] sm:$0xff] %v1735
          %1752 = vst [vmem:[%s313 + $0x38] sm:$0xff] %v1736
          %1753 = vst [vmem:[%s313 + $0x40] sm:$0xff] %v1737
          %1754 = vst [vmem:[%s313 + $0x48] sm:$0xff] %v1738
          %1755 = vst [vmem:[%s313 + $0x50] sm:$0xff] %v1739
          %1756 = vst [vmem:[%s313 + $0x58] sm:$0xff] %v1740
          %1757 = vst [vmem:[%s313 + $0x60] sm:$0xff] %v1741
          %1758 = vst [vmem:[%s313 + $0x68] sm:$0xff] %v1742
          %1759 = vst [vmem:[%s313 + $0x70] sm:$0xff] %v1743
          %1760 = vst [vmem:[%s313 + $0x78] sm:$0xff] %v1744
        $region56: #{feed_forward_module.1} parent=39 // pred_fallthru
          _
        %p1761 = scmp.gt.s32.totalorder %s28, 0
        // Predicated region
        $region57: #{feed_forward_module.1} parent=39 // pred_check
          %p1762 = pneg %p1761
        $region58: #{feed_forward_module.1} parent=39 // pred_check_branch
          %1764 = sbr.rel (%p1762) target = $region60
        $region59: #{feed_forward_module.1} parent=39 // pred_region
          %v1765 = vld [vmem:[%s313] sm:$0xff]
          %v1766 = vld [vmem:[%s313 + $0x8] sm:$0xff]
          %v1767 = vld [vmem:[%s313 + $0x10] sm:$0xff]
          %v1768 = vld [vmem:[%s313 + $0x18] sm:$0xff]
          %v1769 = vld [vmem:[%s313 + $0x20] sm:$0xff]
          %v1770 = vld [vmem:[%s313 + $0x28] sm:$0xff]
          %v1771 = vld [vmem:[%s313 + $0x30] sm:$0xff]
          %v1772 = vld [vmem:[%s313 + $0x38] sm:$0xff]
          %v1773 = vld [vmem:[%s313 + $0x40] sm:$0xff]
          %v1774 = vld [vmem:[%s313 + $0x48] sm:$0xff]
          %v1775 = vld [vmem:[%s313 + $0x50] sm:$0xff]
          %v1776 = vld [vmem:[%s313 + $0x58] sm:$0xff]
          %v1777 = vld [vmem:[%s313 + $0x60] sm:$0xff]
          %v1778 = vld [vmem:[%s313 + $0x68] sm:$0xff]
          %v1779 = vld [vmem:[%s313 + $0x70] sm:$0xff]
          %v1780 = vld [vmem:[%s313 + $0x78] sm:$0xff]
          %v1781 = vadd.f32 %v1765, %v1656
          %v1782 = vadd.f32 %v1766, %v1659
          %v1783 = vadd.f32 %v1767, %v1664
          %v1784 = vadd.f32 %v1768, %v1667
          %v1785 = vadd.f32 %v1769, %v1672
          %v1786 = vadd.f32 %v1770, %v1675
          %v1787 = vadd.f32 %v1771, %v1680
          %v1788 = vadd.f32 %v1772, %v1683
          %v1789 = vadd.f32 %v1773, %v1688
          %v1790 = vadd.f32 %v1774, %v1691
          %v1791 = vadd.f32 %v1775, %v1696
          %v1792 = vadd.f32 %v1776, %v1699
          %v1793 = vadd.f32 %v1777, %v1704
          %v1794 = vadd.f32 %v1778, %v1707
          %v1795 = vadd.f32 %v1779, %v1712
          %v1796 = vadd.f32 %v1780, %v1715
          %1797 = vst [vmem:[%s313] sm:$0xff] %v1781
          %1798 = vst [vmem:[%s313 + $0x8] sm:$0xff] %v1782
          %1799 = vst [vmem:[%s313 + $0x10] sm:$0xff] %v1783
          %1800 = vst [vmem:[%s313 + $0x18] sm:$0xff] %v1784
          %1801 = vst [vmem:[%s313 + $0x20] sm:$0xff] %v1785
          %1802 = vst [vmem:[%s313 + $0x28] sm:$0xff] %v1786
          %1803 = vst [vmem:[%s313 + $0x30] sm:$0xff] %v1787
          %1804 = vst [vmem:[%s313 + $0x38] sm:$0xff] %v1788
          %1805 = vst [vmem:[%s313 + $0x40] sm:$0xff] %v1789
          %1806 = vst [vmem:[%s313 + $0x48] sm:$0xff] %v1790
          %1807 = vst [vmem:[%s313 + $0x50] sm:$0xff] %v1791
          %1808 = vst [vmem:[%s313 + $0x58] sm:$0xff] %v1792
          %1809 = vst [vmem:[%s313 + $0x60] sm:$0xff] %v1793
          %1810 = vst [vmem:[%s313 + $0x68] sm:$0xff] %v1794
          %1811 = vst [vmem:[%s313 + $0x70] sm:$0xff] %v1795
          %1812 = vst [vmem:[%s313 + $0x78] sm:$0xff] %v1796
        $region60: #{feed_forward_module.1} parent=39 // pred_fallthru
          _
        %s1813 = sand.u32 %s168, 1
        %s1814 = scalar_lea.sflag [#allocation4], %s1813
        %s1815 = sand.u32 %s168, 1
        %s1816 = smul.addr %s1815, 128
        %s1817 = scalar_lea.vmem [#allocation8], %s1816
        // Predicated region
        $region61: #{feed_forward_module.1} parent=39 // pred_check
          %p1818 = pneg %p178
        $region62: #{feed_forward_module.1} parent=39 // pred_check_branch
          %1820 = sbr.rel (%p1818) target = $region64
        $region63: #{feed_forward_module.1} parent=39 // pred_region
          %s1821 = smul.u32 16, %s27
          %s1823 = ssub.s32 2048, 2048
          %1824 = vsyncadd %s1814, %s1823
          %s1825 = smul.addr %s1821, 128
          %s1826 = scalar_lea.hbm %s5, %s1825
          %s1827 = sshll.u32 %s1817, 4
          %s1828 = int_to_ptr.vmem [resolvable:$true] %s1827
          %1833 = dma.vmem_to_hbm [thread:$0]  %s1828, 2048, %s1826, %s1814, 128, 128, 8
        $region64: #{feed_forward_module.1} parent=39 // pred_fallthru
          _
      $region40: #{feed_forward_module.1} parent=5 // pred_fallthru
        _
      %p1834 = scmp.le.s32.totalorder 2, %s18
      // Predicated region
      $region65: #{feed_forward_module.1} parent=5 // pred_check
        %p1835 = pneg %p1834
      $region66: #{feed_forward_module.1} parent=5 // pred_check_branch
        %1837 = sbr.rel (%p1835) target = $region68
      $region67: #{feed_forward_module.1} parent=5 // pred_region
        %s1838 = ssub.s32 %s18, 2
        // Predicated region
        $region69: #{feed_forward_module.1} parent=67 // pred_check
          %p1839 = pneg %p184
        $region70: #{feed_forward_module.1} parent=67 // pred_check_branch
          %1841 = sbr.rel (%p1839) target = $region72
        $region71: #{feed_forward_module.1} parent=67 // pred_region
          %s1842 = sand.u32 %s169, 1
          %s1843 = scalar_lea.sflag [#allocation4], %s1842
          %s1844 = sand.u32 %s169, 1
          %s1845 = smul.addr %s1844, 128
          %s1846 = scalar_lea.vmem [#allocation8], %s1845
          %1847 = dma.done %s1843, 2048
        $region72: #{feed_forward_module.1} parent=67 // pred_fallthru
          _
      $region68: #{feed_forward_module.1} parent=5 // pred_fallthru
        _
    $region6: #{feed_forward_module.1} parent=1 // loop_footer
      %s22 = sadd.s32 1, %s18
    $region7: #{feed_forward_module.1} parent=1 // loop_footer_branch
      %17 = sbr.rel target = $region3
    $region8: #{feed_forward_module.1} parent=1 // loop_exit
      _
    %1848 = vsyncpa [#allocation3], 1
    %s1849 = scalar_lea.sflag [#allocation3], 1
    %1850 = vsyncpa %s1849, 1
    %1851 = vsyncpa [#allocation6], 1
    %1852 = vsyncpa [#allocation4], 1
    %s1853 = scalar_lea.sflag [#allocation4], 1
    %1854 = vsyncpa %s1853, 1

</llo_original>
